<compile_context>
chip_gen: v5e
topology: v5e:2x2
jax: 0.10.0
libtpu: 0.0.40
codegen_flags: <defaults>
</compile_context>

<pallas_src>
import math

import jax
import jax.numpy as jnp
from jax.experimental import pallas as pl
from jax.experimental.pallas import tpu as pltpu


# ----------------------------------------------------------------------------
# helpers (plain-JAX glue: constant grids / parameter repacking)
# ----------------------------------------------------------------------------
def _get_p_n(num_param):
    """Mirror of LDConv._get_p_n: per-sample kernel-offset pattern."""
    base_int = round(math.sqrt(num_param))
    row_number = num_param // base_int
    mod_number = num_param % base_int
    p_n_x, p_n_y = [], []
    for i in range(row_number):
        for j in range(base_int):
            p_n_x.append(i)
            p_n_y.append(j)
    for j in range(mod_number):
        p_n_x.append(row_number)
        p_n_y.append(j)
    return (jnp.array(p_n_x, jnp.float32), jnp.array(p_n_y, jnp.float32))


def _make_base(H, W, num_param, stride):
    """p_0 + p_n in (2N, H, W) layout (matches the offset-conv NCHW output)."""
    pnx, pny = _get_p_n(num_param)
    gi = jnp.arange(H, dtype=jnp.float32) * stride
    gj = jnp.arange(W, dtype=jnp.float32) * stride
    # broadcast explicitly so both parts are (N, H, W) before concatenation
    bx = jnp.broadcast_to(gi[None, :, None] + pnx[:, None, None],
                          (num_param, H, W))
    by = jnp.broadcast_to(gj[None, None, :] + pny[:, None, None],
                          (num_param, H, W))
    return jnp.concatenate([bx, by], axis=0)             # (2N, H, W)


def _pick_tp(P, B):
    """Spatial tile: <=256 (VMEM-safe on v5e/v7x), multiple of 128 dividing P,
    and small enough that the grid has >=2 steps for megacore if possible."""
    for tp in (256, 128):
        if P % tp == 0 and (B * (P // tp) >= 2 or tp == 128):
            return tp
    for tp in (256, 128):
        if P % tp == 0:
            return tp
    return P


def _vmem_limit_bytes(N, O, P, TP, H, W):
    """Explicit scoped-VMEM sizing: 2x-buffered blocks + in-body temporaries."""
    blocks = (2 * (N * TP * 4) * 2          # px, py blocks (double buffered)
              + 2 * (O * N * P * 2)         # packed weights (bf16)
              + 2 * (O * 4)                 # BN shift
              + 2 * (O * TP * 4))           # output block
    temps = ((N * H * TP + N * W * TP) * 4  # separable one-hots (f32)
             + N * P * TP * (4 + 2)         # stacked mask f32 + bf16
             + 4 * O * TP * 4)              # acc / activation temporaries
    need = int((blocks + temps) * 1.5)
    return max(32 * 2 ** 20, min(48 * 2 ** 20, need))


# ----------------------------------------------------------------------------
# Pallas kernel
# ----------------------------------------------------------------------------
def _make_kernel(H, W, N, O, P, TP):
    def kernel(px_ref, py_ref, xw_ref, shift_ref, out_ref):
        # Sampling positions for this spatial tile.
        px = px_ref[...]                                  # (N, TP) f32
        py = py_ref[...]                                  # (N, TP) f32

        fx, fy = jnp.floor(px), jnp.floor(py)
        ltx = jnp.clip(fx, 0.0, H - 1.0)
        lty = jnp.clip(fy, 0.0, W - 1.0)
        rbx = jnp.clip(fx + 1.0, 0.0, H - 1.0)
        rby = jnp.clip(fy + 1.0, 0.0, W - 1.0)
        pxc = jnp.clip(px, 0.0, H - 1.0)
        pyc = jnp.clip(py, 0.0, W - 1.0)

        # Separable bilinear weights: g_lt = wx_lt*wy_lt, g_rb = wx_rb*wy_rb,
        # g_lb = wx_lt*wy_rb, g_rt = wx_rb*wy_lt  (f32 math).
        wx_lt = 1.0 + (ltx - pxc)                         # (N, TP)
        wx_rb = 1.0 - (rbx - pxc)
        wy_lt = 1.0 + (lty - pyc)
        wy_rb = 1.0 - (rby - pyc)

        iltx = ltx.astype(jnp.int32)
        irbx = rbx.astype(jnp.int32)
        ilty = lty.astype(jnp.int32)
        irby = rby.astype(jnp.int32)

        # "Two-nonzero" one-hots along the source row / column axes.
        rows_h = jax.lax.broadcasted_iota(jnp.int32, (N, H, TP), 1)
        rows_w = jax.lax.broadcasted_iota(jnp.int32, (N, W, TP), 1)
        WX = (jnp.where(rows_h == iltx[:, None, :], wx_lt[:, None, :], 0.0)
              + jnp.where(rows_h == irbx[:, None, :], wx_rb[:, None, :], 0.0))
        WY = (jnp.where(rows_w == ilty[:, None, :], wy_lt[:, None, :], 0.0)
              + jnp.where(rows_w == irby[:, None, :], wy_rb[:, None, :], 0.0))

        # Stacked bilinear gather mask: m[n*P + r*W + c, t] = WX[n,r,t]*WY[n,c,t]
        # (exactly reproduces the 4-term gather, incl. clamped-index coincidence).
        m = (WX[:, :, None, :] * WY[:, None, :, :]).reshape(N * P, TP)
        m = m.astype(jnp.bfloat16)                        # single cast before MXU

        # One fused long-K matmul: xw (O, N*P) bf16 @ m (N*P, TP) bf16 -> f32.
        acc = jnp.dot(xw_ref[...], m, preferred_element_type=jnp.float32)

        y = acc + shift_ref[...]                          # BN shift (scale folded)
        out_ref[...] = (y * jax.nn.sigmoid(y)).astype(out_ref.dtype)  # SiLU

    return kernel


# ----------------------------------------------------------------------------
# wrapper
# ----------------------------------------------------------------------------
def ldconv_forward(x, params, num_param=3, stride=1):
    """x: (B, C, H, W) float32, NCHW. Returns (B, outc, H, W)."""
    assert stride == 1  # TODO(synk): stride > 1 path of LDConv not implemented
    B, C, H, W = x.shape
    N = num_param
    p_w, p_b = params["p_w"], params["p_b"]
    conv_w = params["conv_w"]
    gamma, beta = params["gamma"], params["beta"]
    mean, var = params["mean"], params["var"]
    O = conv_w.shape[0]
    P = H * W
    TP = _pick_tp(P, B)

    x = x.astype(jnp.float32)

    # --- 3x3 offset conv (tiny, 2N channels): plain XLA conv in the wrapper ---
    off = jax.lax.conv_general_dilated(
        x, p_w, window_strides=(stride, stride), padding=((1, 1), (1, 1)),
        dimension_numbers=("NCHW", "OIHW", "NCHW")) + p_b[None, :, None, None]
    base = _make_base(H, W, N, stride)                    # (2N, H, W)
    p = (off + base[None]).reshape(B, 2 * N, P)           # sampling positions
    p_x = p[:, :N, :]                                     # (B, N, P)
    p_y = p[:, N:, :]                                     # (B, N, P)

    # --- fold final conv + BN scale into per-source-pixel weights ------------
    eps = 1e-5
    inv_std = 1.0 / jnp.sqrt(var + eps)
    scale = gamma * inv_std                               # (O,)
    shift_col = (beta - mean * scale).reshape(O, 1)       # (O, 1)

    xr = x.reshape(B, C, P)                               # (B, C, P)
    wmat3 = jnp.transpose(conv_w[..., 0], (2, 0, 1)) * scale[None, :, None]  # (N,O,C)
    # f32 precompute, packed as (B, O, N*P) so the kernel runs ONE long-K matmul
    xw = jnp.einsum("noc,bcp->bnop", wmat3, xr)           # (B, N, O, P) f32
    xw = jnp.transpose(xw, (0, 2, 1, 3)).reshape(B, O, N * P)
    xw = xw.astype(jnp.bfloat16)                          # MXU-native operand

    kernel = _make_kernel(H, W, N, O, P, TP)
    out = pl.pallas_call(
        kernel,
        out_shape=jax.ShapeDtypeStruct((B, O, P), jnp.float32),
        grid_spec=pltpu.PrefetchScalarGridSpec(
            num_scalar_prefetch=0,
            grid=(B, P // TP),
            in_specs=[
                pl.BlockSpec((None, N, TP), lambda b, t: (b, 0, t)),
                pl.BlockSpec((None, N, TP), lambda b, t: (b, 0, t)),
                pl.BlockSpec((None, O, N * P), lambda b, t: (b, 0, 0)),
                pl.BlockSpec((O, 1), lambda b, t: (0, 0)),
            ],
            out_specs=pl.BlockSpec((None, O, TP), lambda b, t: (b, 0, t)),
        ),
        compiler_params=pltpu.CompilerParams(
            dimension_semantics=("parallel", "parallel"),
            vmem_limit_bytes=_vmem_limit_bytes(N, O, P, TP, H, W)),
    )(p_x, p_y, xw, shift_col)

    return out.reshape(B, O, H, W)                        # already NCHW


# ----------------------------------------------------------------------------
# pure-JAX reference (mirrors the PyTorch forward, eval-mode BN)
# ----------------------------------------------------------------------------
def ldconv_reference(x, params, num_param=3, stride=1):
    B, C, H, W = x.shape
    N = num_param
    x = x.astype(jnp.float32)
    p_w, p_b = params["p_w"], params["p_b"]
    conv_w = params["conv_w"]
    gamma, beta = params["gamma"], params["beta"]
    mean, var = params["mean"], params["var"]

    off = jax.lax.conv_general_dilated(
        x, p_w, window_strides=(stride, stride), padding=((1, 1), (1, 1)),
        dimension_numbers=("NCHW", "OIHW", "NCHW")) + p_b[None, :, None, None]
    h, w = off.shape[2], off.shape[3]
    pnx, pny = _get_p_n(N)
    p0x = (jnp.arange(h, dtype=jnp.float32) * stride)[None, None, :, None]
    p0y = (jnp.arange(w, dtype=jnp.float32) * stride)[None, None, None, :]
    p_x = p0x + pnx[None, :, None, None] + off[:, :N]
    p_y = p0y + pny[None, :, None, None] + off[:, N:]
    p = jnp.transpose(jnp.concatenate([p_x, p_y], axis=1), (0, 2, 3, 1))

    def clampxy(q):
        return jnp.concatenate([jnp.clip(q[..., :N], 0, H - 1),
                                jnp.clip(q[..., N:], 0, W - 1)], axis=-1)

    q_lt = clampxy(jnp.floor(p))
    q_rb = clampxy(jnp.floor(p) + 1)
    q_lb = jnp.concatenate([q_lt[..., :N], q_rb[..., N:]], axis=-1)
    q_rt = jnp.concatenate([q_rb[..., :N], q_lt[..., N:]], axis=-1)
    p = clampxy(p)

    g_lt = (1 + (q_lt[..., :N] - p[..., :N])) * (1 + (q_lt[..., N:] - p[..., N:]))
    g_rb = (1 - (q_rb[..., :N] - p[..., :N])) * (1 - (q_rb[..., N:] - p[..., N:]))
    g_lb = (1 + (q_lb[..., :N] - p[..., :N])) * (1 - (q_lb[..., N:] - p[..., N:]))
    g_rt = (1 - (q_rt[..., :N] - p[..., :N])) * (1 + (q_rt[..., N:] - p[..., N:]))

    xf = x.reshape(B, C, H * W)

    def get_x_q(q):
        idx = (q[..., :N] * W + q[..., N:]).astype(jnp.int32).reshape(B, 1, -1)
        idx = jnp.broadcast_to(idx, (B, C, h * w * N))
        return jnp.take_along_axis(xf, idx, axis=2).reshape(B, C, h, w, N)

    x_off = (g_lt[:, None] * get_x_q(q_lt) + g_rb[:, None] * get_x_q(q_rb)
             + g_lb[:, None] * get_x_q(q_lb) + g_rt[:, None] * get_x_q(q_rt))
    x_off = jnp.transpose(x_off, (0, 1, 2, 4, 3)).reshape(B, C, h * N, w)

    out = jax.lax.conv_general_dilated(
        x_off, conv_w, window_strides=(N, 1), padding="VALID",
        dimension_numbers=("NCHW", "OIHW", "NCHW"))
    eps = 1e-5
    out = (out - mean[None, :, None, None]) / jnp.sqrt(var + eps)[None, :, None, None]
    out = out * gamma[None, :, None, None] + beta[None, :, None, None]
    return out * jax.nn.sigmoid(out)


# ----------------------------------------------------------------------------
if __name__ == "__main__":
    key = jax.random.PRNGKey(0)
    B, C, H, W = 2, 4, 16, 16
    O, N = 8, 3
    ks = jax.random.split(key, 8)

    x = jax.random.normal(ks[0], (B, C, H, W), jnp.float32)
    # Deterministic synthetic parameters (shapes from LDConv.__init__).
    # NOTE: p_conv.weight is constant-0 in the original init; we use small
    # random values so the deformable-offset path is exercised non-trivially.
    params = dict(
        p_w=0.1 * jax.random.normal(ks[1], (2 * N, C, 3, 3), jnp.float32),
        p_b=0.2 * jax.random.normal(ks[2], (2 * N,), jnp.float32),
        conv_w=jax.random.normal(ks[3], (O, C, N, 1), jnp.float32) / math.sqrt(C * N),
        gamma=1.0 + 0.1 * jax.random.normal(ks[4], (O,), jnp.float32),
        beta=0.1 * jax.random.normal(ks[5], (O,), jnp.float32),
        mean=0.1 * jax.random.normal(ks[6], (O,), jnp.float32),
        var=1.0 + 0.1 * jax.random.uniform(ks[7], (O,), jnp.float32),
    )

    out = ldconv_forward(x, params, num_param=N, stride=1)
    out = jax.block_until_ready(out)
    assert out.shape == (B, O, H, W)

    ref = ldconv_reference(x, params, num_param=N, stride=1)
    err = float(jnp.max(jnp.abs(out - ref)))
    # bf16 MXU gather path -> slightly looser tolerance than a pure-f32 kernel.
    assert err < 5e-2, f"max abs err {err}"
    print("KERNEL_OK")
</pallas_src>

<mosaic_0001>
module attributes {stable_mosaic.version = 11 : i64} {
  func.func @kernel(%arg0: i32, %arg1: i32, %arg2: memref<1x3x256xf32, #tpu.memory_space<vmem>>, %arg3: memref<1x3x256xf32, #tpu.memory_space<vmem>>, %arg4: memref<1x8x768xbf16, #tpu.memory_space<vmem>>, %arg5: memref<8x1xf32, #tpu.memory_space<vmem>>, %arg6: memref<1x8x256xf32, #tpu.memory_space<vmem>>) attributes {dimension_semantics = [#tpu.dimension_semantics<parallel>, #tpu.dimension_semantics<parallel>], iteration_bounds = array<i64: 2, 1>, scalar_prefetch = 0 : i64, scratch_operands = 0 : i64, tpu.core_type = #tpu.core_type<tc>, window_params = [{transform_indices = @transform_0, window_bounds = array<i64: 1, 3, 256>}, {transform_indices = @transform_1, window_bounds = array<i64: 1, 3, 256>}, {transform_indices = @transform_2, window_bounds = array<i64: 1, 8, 768>}, {pipeline_mode = #tpu.pipeline_mode<synchronous>, transform_indices = @transform_3, window_bounds = array<i64: 8, 1>}, {transform_indices = @transform_4, window_bounds = array<i64: 1, 8, 256>}]} {
    %c0 = arith.constant 0 : index
    %c0_0 = arith.constant 0 : index
    %c0_1 = arith.constant 0 : index
    %0 = vector.load %arg2[%c0, %c0_0, %c0_1] : memref<1x3x256xf32, #tpu.memory_space<vmem>>, vector<1x3x256xf32>
    %1 = vector.shape_cast %0 : vector<1x3x256xf32> to vector<3x256xf32>
    %c0_2 = arith.constant 0 : index
    %c0_3 = arith.constant 0 : index
    %c0_4 = arith.constant 0 : index
    %2 = vector.load %arg3[%c0_2, %c0_3, %c0_4] : memref<1x3x256xf32, #tpu.memory_space<vmem>>, vector<1x3x256xf32>
    %3 = vector.shape_cast %2 : vector<1x3x256xf32> to vector<3x256xf32>
    %4 = math.floor %1 : vector<3x256xf32>
    %5 = math.floor %3 : vector<3x256xf32>
    %cst = arith.constant 0.000000e+00 : f32
    %cst_5 = arith.constant 1.500000e+01 : f32
    %6 = vector.broadcast %cst : f32 to vector<3x256xf32>
    %7 = arith.maximumf %6, %4 : vector<3x256xf32>
    %8 = vector.broadcast %cst_5 : f32 to vector<3x256xf32>
    %9 = arith.minimumf %8, %7 : vector<3x256xf32>
    %cst_6 = arith.constant 0.000000e+00 : f32
    %cst_7 = arith.constant 1.500000e+01 : f32
    %10 = vector.broadcast %cst_6 : f32 to vector<3x256xf32>
    %11 = arith.maximumf %10, %5 : vector<3x256xf32>
    %12 = vector.broadcast %cst_7 : f32 to vector<3x256xf32>
    %13 = arith.minimumf %12, %11 : vector<3x256xf32>
    %cst_8 = arith.constant 1.000000e+00 : f32
    %14 = vector.broadcast %cst_8 : f32 to vector<3x256xf32>
    %15 = arith.addf %4, %14 : vector<3x256xf32>
    %cst_9 = arith.constant 0.000000e+00 : f32
    %cst_10 = arith.constant 1.500000e+01 : f32
    %16 = vector.broadcast %cst_9 : f32 to vector<3x256xf32>
    %17 = arith.maximumf %16, %15 : vector<3x256xf32>
    %18 = vector.broadcast %cst_10 : f32 to vector<3x256xf32>
    %19 = arith.minimumf %18, %17 : vector<3x256xf32>
    %cst_11 = arith.constant 1.000000e+00 : f32
    %20 = vector.broadcast %cst_11 : f32 to vector<3x256xf32>
    %21 = arith.addf %5, %20 : vector<3x256xf32>
    %cst_12 = arith.constant 0.000000e+00 : f32
    %cst_13 = arith.constant 1.500000e+01 : f32
    %22 = vector.broadcast %cst_12 : f32 to vector<3x256xf32>
    %23 = arith.maximumf %22, %21 : vector<3x256xf32>
    %24 = vector.broadcast %cst_13 : f32 to vector<3x256xf32>
    %25 = arith.minimumf %24, %23 : vector<3x256xf32>
    %cst_14 = arith.constant 0.000000e+00 : f32
    %cst_15 = arith.constant 1.500000e+01 : f32
    %26 = vector.broadcast %cst_14 : f32 to vector<3x256xf32>
    %27 = arith.maximumf %26, %1 : vector<3x256xf32>
    %28 = vector.broadcast %cst_15 : f32 to vector<3x256xf32>
    %29 = arith.minimumf %28, %27 : vector<3x256xf32>
    %cst_16 = arith.constant 0.000000e+00 : f32
    %cst_17 = arith.constant 1.500000e+01 : f32
    %30 = vector.broadcast %cst_16 : f32 to vector<3x256xf32>
    %31 = arith.maximumf %30, %3 : vector<3x256xf32>
    %32 = vector.broadcast %cst_17 : f32 to vector<3x256xf32>
    %33 = arith.minimumf %32, %31 : vector<3x256xf32>
    %34 = arith.subf %9, %29 : vector<3x256xf32>
    %cst_18 = arith.constant 1.000000e+00 : f32
    %35 = vector.broadcast %cst_18 : f32 to vector<3x256xf32>
    %36 = arith.addf %35, %34 : vector<3x256xf32>
    %37 = arith.subf %19, %29 : vector<3x256xf32>
    %cst_19 = arith.constant 1.000000e+00 : f32
    %38 = vector.broadcast %cst_19 : f32 to vector<3x256xf32>
    %39 = arith.subf %38, %37 : vector<3x256xf32>
    %40 = arith.subf %13, %33 : vector<3x256xf32>
    %cst_20 = arith.constant 1.000000e+00 : f32
    %41 = vector.broadcast %cst_20 : f32 to vector<3x256xf32>
    %42 = arith.addf %41, %40 : vector<3x256xf32>
    %43 = arith.subf %25, %33 : vector<3x256xf32>
    %cst_21 = arith.constant 1.000000e+00 : f32
    %44 = vector.broadcast %cst_21 : f32 to vector<3x256xf32>
    %45 = arith.subf %44, %43 : vector<3x256xf32>
    %46 = arith.fptosi %9 : vector<3x256xf32> to vector<3x256xi32>
    %47 = arith.fptosi %19 : vector<3x256xf32> to vector<3x256xi32>
    %48 = arith.fptosi %13 : vector<3x256xf32> to vector<3x256xi32>
    %49 = arith.fptosi %25 : vector<3x256xf32> to vector<3x256xi32>
    %50 = tpu.iota {dimensions = array<i32: 1>} : vector<3x16x256xi32>
    %51 = tpu.iota {dimensions = array<i32: 1>} : vector<3x16x256xi32>
    %52 = vector.shape_cast %46 : vector<3x256xi32> to vector<3x1x256xi32>
    %53 = vector.broadcast %52 : vector<3x1x256xi32> to vector<3x16x256xi32>
    %54 = arith.cmpi eq, %50, %53 : vector<3x16x256xi32>
    %55 = vector.shape_cast %36 : vector<3x256xf32> to vector<3x1x256xf32>
    %cst_22 = arith.constant 0.000000e+00 : f32
    %56 = vector.shape_cast %55 : vector<3x1x256xf32> to vector<3x1x256xf32>
    %57 = vector.broadcast %56 : vector<3x1x256xf32> to vector<3x16x256xf32>
    %58 = vector.broadcast %cst_22 : f32 to vector<3x16x256xf32>
    %59 = arith.select %54, %57, %58 : vector<3x16x256xi1>, vector<3x16x256xf32>
    %60 = vector.shape_cast %47 : vector<3x256xi32> to vector<3x1x256xi32>
    %61 = vector.broadcast %60 : vector<3x1x256xi32> to vector<3x16x256xi32>
    %62 = arith.cmpi eq, %50, %61 : vector<3x16x256xi32>
    %63 = vector.shape_cast %39 : vector<3x256xf32> to vector<3x1x256xf32>
    %cst_23 = arith.constant 0.000000e+00 : f32
    %64 = vector.shape_cast %63 : vector<3x1x256xf32> to vector<3x1x256xf32>
    %65 = vector.broadcast %64 : vector<3x1x256xf32> to vector<3x16x256xf32>
    %66 = vector.broadcast %cst_23 : f32 to vector<3x16x256xf32>
    %67 = arith.select %62, %65, %66 : vector<3x16x256xi1>, vector<3x16x256xf32>
    %68 = arith.addf %59, %67 : vector<3x16x256xf32>
    %69 = vector.shape_cast %48 : vector<3x256xi32> to vector<3x1x256xi32>
    %70 = vector.broadcast %69 : vector<3x1x256xi32> to vector<3x16x256xi32>
    %71 = arith.cmpi eq, %51, %70 : vector<3x16x256xi32>
    %72 = vector.shape_cast %42 : vector<3x256xf32> to vector<3x1x256xf32>
    %cst_24 = arith.constant 0.000000e+00 : f32
    %73 = vector.shape_cast %72 : vector<3x1x256xf32> to vector<3x1x256xf32>
    %74 = vector.broadcast %73 : vector<3x1x256xf32> to vector<3x16x256xf32>
    %75 = vector.broadcast %cst_24 : f32 to vector<3x16x256xf32>
    %76 = arith.select %71, %74, %75 : vector<3x16x256xi1>, vector<3x16x256xf32>
    %77 = vector.shape_cast %49 : vector<3x256xi32> to vector<3x1x256xi32>
    %78 = vector.broadcast %77 : vector<3x1x256xi32> to vector<3x16x256xi32>
    %79 = arith.cmpi eq, %51, %78 : vector<3x16x256xi32>
    %80 = vector.shape_cast %45 : vector<3x256xf32> to vector<3x1x256xf32>
    %cst_25 = arith.constant 0.000000e+00 : f32
    %81 = vector.shape_cast %80 : vector<3x1x256xf32> to vector<3x1x256xf32>
    %82 = vector.broadcast %81 : vector<3x1x256xf32> to vector<3x16x256xf32>
    %83 = vector.broadcast %cst_25 : f32 to vector<3x16x256xf32>
    %84 = arith.select %79, %82, %83 : vector<3x16x256xi1>, vector<3x16x256xf32>
    %85 = arith.addf %76, %84 : vector<3x16x256xf32>
    %86 = vector.shape_cast %68 : vector<3x16x256xf32> to vector<3x16x1x256xf32>
    %87 = vector.shape_cast %85 : vector<3x16x256xf32> to vector<3x1x16x256xf32>
    %88 = vector.broadcast %86 : vector<3x16x1x256xf32> to vector<3x16x16x256xf32>
    %89 = vector.broadcast %87 : vector<3x1x16x256xf32> to vector<3x16x16x256xf32>
    %90 = arith.mulf %88, %89 : vector<3x16x16x256xf32>
    %91 = vector.shape_cast %90 : vector<3x16x16x256xf32> to vector<768x256xf32>
    %92 = arith.truncf %91 : vector<768x256xf32> to vector<768x256xbf16>
    %c0_26 = arith.constant 0 : index
    %c0_27 = arith.constant 0 : index
    %c0_28 = arith.constant 0 : index
    %93 = vector.load %arg4[%c0_26, %c0_27, %c0_28] : memref<1x8x768xbf16, #tpu.memory_space<vmem>>, vector<1x8x768xbf16>
    %94 = vector.shape_cast %93 : vector<1x8x768xbf16> to vector<8x768xbf16>
    %cst_29 = arith.constant dense<0.000000e+00> : vector<8x256xf32>
    %95 = tpu.matmul %94, %92, %cst_29 {dimension_numbers = #tpu.dot_dimension_numbers<[1], [0], [0], [1], [0, 0, 1, 1], [], []>} : vector<8x768xbf16>, vector<768x256xbf16>, vector<8x256xf32> -> vector<8x256xf32>
    %c0_30 = arith.constant 0 : index
    %c0_31 = arith.constant 0 : index
    %96 = vector.load %arg5[%c0_30, %c0_31] : memref<8x1xf32, #tpu.memory_space<vmem>>, vector<8x1xf32>
    %97 = vector.broadcast %96 : vector<8x1xf32> to vector<8x256xf32>
    %98 = arith.addf %95, %97 : vector<8x256xf32>
    %99 = arith.negf %98 : vector<8x256xf32>
    %100 = math.exp %99 : vector<8x256xf32>
    %cst_32 = arith.constant 1.000000e+00 : f32
    %101 = vector.broadcast %cst_32 : f32 to vector<8x256xf32>
    %102 = arith.addf %101, %100 : vector<8x256xf32>
    %103 = arith.divf %101, %102 : vector<8x256xf32>
    %104 = arith.mulf %98, %103 : vector<8x256xf32>
    %c0_33 = arith.constant 0 : index
    %c0_34 = arith.constant 0 : index
    %c0_35 = arith.constant 0 : index
    %105 = vector.load %arg6[%c0_33, %c0_34, %c0_35] : memref<1x8x256xf32, #tpu.memory_space<vmem>>, vector<1x8x256xf32>
    %106 = vector.shape_cast %105 : vector<1x8x256xf32> to vector<8x256xf32>
    %107 = vector.shape_cast %104 : vector<8x256xf32> to vector<1x8x256xf32>
    tpu.vector_store %arg6[%c0_33, %c0_34, %c0_35], %107 {strides = array<i32>} : memref<1x8x256xf32, #tpu.memory_space<vmem>>, vector<1x8x256xf32>,
    return
  }
  func.func @transform_0(%arg0: i32, %arg1: i32) -> (i32, i32, i32) {
    %c0_i32 = arith.constant 0 : i32
    %c0_i32_0 = arith.constant 0 : i32
    return %arg0, %c0_i32, %arg1 : i32, i32, i32
  }
  func.func @transform_1(%arg0: i32, %arg1: i32) -> (i32, i32, i32) {
    %c0_i32 = arith.constant 0 : i32
    %c0_i32_0 = arith.constant 0 : i32
    return %arg0, %c0_i32, %arg1 : i32, i32, i32
  }
  func.func @transform_2(%arg0: i32, %arg1: i32) -> (i32, i32, i32) {
    %c0_i32 = arith.constant 0 : i32
    %c0_i32_0 = arith.constant 0 : i32
    %c0_i32_1 = arith.constant 0 : i32
    return %arg0, %c0_i32, %c0_i32_0 : i32, i32, i32
  }
  func.func @transform_3(%arg0: i32, %arg1: i32) -> (i32, i32) {
    %c0_i32 = arith.constant 0 : i32
    %c0_i32_0 = arith.constant 0 : i32
    %c0_i32_1 = arith.constant 0 : i32
    return %c0_i32, %c0_i32_0 : i32, i32
  }
  func.func @transform_4(%arg0: i32, %arg1: i32) -> (i32, i32, i32) {
    %c0_i32 = arith.constant 0 : i32
    %c0_i32_0 = arith.constant 0 : i32
    return %arg0, %c0_i32, %arg1 : i32, i32, i32
  }
}

</mosaic_0001>

<llo_original>
// kernel: tpu_custom_call.1
$region0: #{tpu_custom_call.1}
  #allocation0 [shape = 'u32[]', space=smem, size = 0x4, offset = 0x4, fixed_abs, tag = 'smem constant byte address 0x4 - core index']
  #allocation1 [shape = 'u32[72,128]{1,0:T(1,128)}', space=vmem, size = 0x9000, scoped, tag = 'internal scratch']
  %s0 = inlined_call_operand.vmem [shape: f32[2,3,256], index: 0, kind: input, shape index: {}]
  %s1 = inlined_call_operand.vmem [shape: f32[2,3,256], index: 1, kind: input, shape index: {}]
  %s2 = inlined_call_operand.hbm [shape: bf16[2,8,768], index: 2, kind: input, shape index: {}]
  %s3 = inlined_call_operand.vmem [shape: f32[8,1], index: 3, kind: input, shape index: {}]
  %s4 = inlined_call_operand.hbm [shape: f32[2,8,256], index: 4, kind: output, shape index: {}]
  %s5 = sld [smem:[#allocation0]]
  $region53: #{tpu_custom_call.1} parent=0
    _
  %s7 = ssub.s32 1, %s5
  %s8 = scalar_select 0, %s7, %s5
  $region1: #{tpu_custom_call.1} parent=0
    #allocation2 [shape = 'u8[24576]{0}', space=vmem, size = 0x6000, scoped, tag = 'input window, operand 2']
    #allocation3 [shape = 's32[2]{0}', space=sflag, size = 0x8, scoped, tag = 'scoped memory for tpu_custom_call.1']
    #allocation4 [shape = 's32[2]{0}', space=sflag, size = 0x8, scoped, tag = 'scoped memory for tpu_custom_call.1']
    #allocation5 [shape = 'u8[16384]{0}', space=vmem, size = 0x4000, scoped, tag = 'output window, operand 0']
    %9 = vsyncpa [#allocation3], 0
    %s10 = scalar_lea.sflag [#allocation3], 1
    %11 = vsyncpa %s10, 0
    %12 = vsyncpa [#allocation4], 0
    %s13 = scalar_lea.sflag [#allocation4], 1
    %14 = vsyncpa %s13, 0
    loop: start=0, step=1, limit=4
    $region2: #{tpu_custom_call.1} parent=1 // loop_pre_header
      _
    $region3: #{tpu_custom_call.1} parent=1 // loop_header
      %s16 = sphi 0, %s20
      %p17 = scmp.ge.s32.totalorder %s16, 4
      %s23 = sphi 0, %s35
      %s24 = sphi 0, %s31
      %s25 = sphi 0, %s23
      %s26 = sphi 0, %s24
      %s27 = sphi 0, %s25
      %s28 = sphi 0, %s26
      %s40 = sphi 0, %s42
      %s43 = sphi 0, %s40
      %s44 = sphi 0, %s43
      %s60 = sphi 0, %s44
      %s68 = sphi 0, %s70
      %s71 = sphi 0, %s68
      %s72 = sphi 0, %s71
      %s88 = sphi 0, %s72
      %s94 = sphi 0, %s96
      %s97 = sphi 0, %s94
      %s98 = sphi 0, %s97
      %s114 = sphi 0, %s98
      %s118 = sphi 0, %s118
      %s120 = sphi 0, %s118
      %s121 = sphi 0, %s120
      %s135 = sphi 0, %s121
      %s143 = sphi 0, %s145
      %s146 = sphi 0, %s143
      %s147 = sphi 0, %s146
      %s163 = sphi 0, %s147
    $region4: #{tpu_custom_call.1} parent=1 // loop_header_branch
      %19 = sbr.rel (%p17) target = $region8
    $region5: #{tpu_custom_call.1} parent=1 // loop_body
      %s21 = ssub.s32 %s16, 1
      %s22 = ssub.s32 %s16, 2
      %s29 = sadd.s32 1, %s24
      %p30 = scmp.ge.s32.totalorder %s29, 1
      %s31 = scalar_select %p30, 0, %s29
      %s32 = sadd.s32 1, %s23
      %s33 = scalar_select %p30, %s32, %s23
      %p34 = scmp.ge.s32.totalorder %s33, 2
      %s35 = scalar_select %p34, 0, %s33
      %s36 = ssub.s32 %s23, %s35
      %s37 = ssub.s32 %s24, %s31
      %s38 = sor.u32 %s36, %s37
      %p39 = scmp.eq.s32.totalorder %s38, 0
      %s41 = sadd.s32 %s40, 1
      %s42 = scalar_select %p39, %s40, %s41
      %p45 = pneg %p39
      %p46 = scmp.eq.s32.totalorder %s16, 1
      %p47 = por %p45, %p46
      %p48 = scmp.ne.s32.totalorder %s40, %s43
      %p49 = scmp.eq.s32.totalorder %s16, 0
      %p50 = por %p48, %p49
      %p51 = scmp.ne.s32.totalorder %s40, %s43
      %p52 = scmp.eq.s32.totalorder %s21, 1
      %p53 = por %p51, %p52
      %p54 = scmp.ne.s32.totalorder %s43, %s44
      %p55 = scmp.eq.s32.totalorder %s21, 0
      %p56 = por %p54, %p55
      %p57 = scmp.ne.s32.totalorder %s43, %s44
      %p58 = scmp.eq.s32.totalorder %s22, 1
      %p59 = por %p57, %p58
      %p61 = scmp.ne.s32.totalorder %s44, %s60
      %p62 = scmp.eq.s32.totalorder %s22, 0
      %p63 = por %p61, %p62
      %s64 = ssub.s32 %s23, %s35
      %s65 = ssub.s32 %s24, %s31
      %s66 = sor.u32 %s64, %s65
      %p67 = scmp.eq.s32.totalorder %s66, 0
      %s69 = sadd.s32 %s68, 1
      %s70 = scalar_select %p67, %s68, %s69
      %p73 = pneg %p67
      %p74 = scmp.eq.s32.totalorder %s16, 1
      %p75 = por %p73, %p74
      %p76 = scmp.ne.s32.totalorder %s68, %s71
      %p77 = scmp.eq.s32.totalorder %s16, 0
      %p78 = por %p76, %p77
      %p79 = scmp.ne.s32.totalorder %s68, %s71
      %p80 = scmp.eq.s32.totalorder %s21, 1
      %p81 = por %p79, %p80
      %p82 = scmp.ne.s32.totalorder %s71, %s72
      %p83 = scmp.eq.s32.totalorder %s21, 0
      %p84 = por %p82, %p83
      %p85 = scmp.ne.s32.totalorder %s71, %s72
      %p86 = scmp.eq.s32.totalorder %s22, 1
      %p87 = por %p85, %p86
      %p89 = scmp.ne.s32.totalorder %s72, %s88
      %p90 = scmp.eq.s32.totalorder %s22, 0
      %p91 = por %p89, %p90
      %s92 = ssub.s32 %s23, %s35
      %p93 = scmp.eq.s32.totalorder %s92, 0
      %s95 = sadd.s32 %s94, 1
      %s96 = scalar_select %p93, %s94, %s95
      %p99 = pneg %p93
      %p100 = scmp.eq.s32.totalorder %s16, 1
      %p101 = por %p99, %p100
      %p102 = scmp.ne.s32.totalorder %s94, %s97
      %p103 = scmp.eq.s32.totalorder %s16, 0
      %p104 = por %p102, %p103
      %p105 = scmp.ne.s32.totalorder %s94, %s97
      %p106 = scmp.eq.s32.totalorder %s21, 1
      %p107 = por %p105, %p106
      %p108 = scmp.ne.s32.totalorder %s97, %s98
      %p109 = scmp.eq.s32.totalorder %s21, 0
      %p110 = por %p108, %p109
      %p111 = scmp.ne.s32.totalorder %s97, %s98
      %p112 = scmp.eq.s32.totalorder %s22, 1
      %p113 = por %p111, %p112
      %p115 = scmp.ne.s32.totalorder %s98, %s114
      %p116 = scmp.eq.s32.totalorder %s22, 0
      %p117 = por %p115, %p116
      %s119 = sadd.s32 %s118, 1
      %p122 = scmp.eq.s32.totalorder %s16, 1
      %p123 = scmp.ne.s32.totalorder %s118, %s120
      %p124 = scmp.eq.s32.totalorder %s16, 0
      %p125 = por %p123, %p124
      %p126 = scmp.ne.s32.totalorder %s118, %s120
      %p127 = scmp.eq.s32.totalorder %s21, 1
      %p128 = por %p126, %p127
      %p129 = scmp.ne.s32.totalorder %s120, %s121
      %p130 = scmp.eq.s32.totalorder %s21, 0
      %p131 = por %p129, %p130
      %p132 = scmp.ne.s32.totalorder %s120, %s121
      %p133 = scmp.eq.s32.totalorder %s22, 1
      %p134 = por %p132, %p133
      %p136 = scmp.ne.s32.totalorder %s121, %s135
      %p137 = scmp.eq.s32.totalorder %s22, 0
      %p138 = por %p136, %p137
      %s139 = ssub.s32 %s23, %s35
      %s140 = ssub.s32 %s24, %s31
      %s141 = sor.u32 %s139, %s140
      %p142 = scmp.eq.s32.totalorder %s141, 0
      %s144 = sadd.s32 %s143, 1
      %s145 = scalar_select %p142, %s143, %s144
      %p148 = pneg %p142
      %p149 = scmp.eq.s32.totalorder %s16, 1
      %p150 = por %p148, %p149
      %p151 = scmp.ne.s32.totalorder %s143, %s146
      %p152 = scmp.eq.s32.totalorder %s16, 0
      %p153 = por %p151, %p152
      %p154 = scmp.ne.s32.totalorder %s143, %s146
      %p155 = scmp.eq.s32.totalorder %s21, 1
      %p156 = por %p154, %p155
      %p157 = scmp.ne.s32.totalorder %s146, %s147
      %p158 = scmp.eq.s32.totalorder %s21, 0
      %p159 = por %p157, %p158
      %p160 = scmp.ne.s32.totalorder %s146, %s147
      %p161 = scmp.eq.s32.totalorder %s22, 1
      %p162 = por %p160, %p161
      %p164 = scmp.ne.s32.totalorder %s147, %s163
      %p165 = scmp.eq.s32.totalorder %s22, 0
      %p166 = por %p164, %p165
      %p167 = scmp.le.s32.totalorder 1, %s16
      %p168 = scmp.lt.s32.totalorder %s16, 3
      %p169 = pnand %p167, %p168
      %p170 = pneg %p169
      // Predicated region
      $region9: #{tpu_custom_call.1} parent=5 // pred_check
        _
      $region10: #{tpu_custom_call.1} parent=5 // pred_check_branch
        %172 = sbr.rel (%p169) target = $region12
      $region11: #{tpu_custom_call.1} parent=5 // pred_region
        %s173 = ssub.s32 %s16, 1
        // Predicated region
        $region13: #{tpu_custom_call.1} parent=11 // pred_check
          %p174 = pneg %p131
        $region14: #{tpu_custom_call.1} parent=11 // pred_check_branch
          %176 = sbr.rel (%p174) target = $region16
        $region15: #{tpu_custom_call.1} parent=11 // pred_region
          _
        $region16: #{tpu_custom_call.1} parent=11 // pred_fallthru
          _
      $region12: #{tpu_custom_call.1} parent=5 // pred_fallthru
        _
      %p177 = scmp.lt.s32.totalorder %s16, 2
      // Predicated region
      $region17: #{tpu_custom_call.1} parent=5 // pred_check
        %p178 = pneg %p177
      $region18: #{tpu_custom_call.1} parent=5 // pred_check_branch
        %180 = sbr.rel (%p178) target = $region20
      $region19: #{tpu_custom_call.1} parent=5 // pred_region
        // Predicated region
        $region21: #{tpu_custom_call.1} parent=19 // pred_check
          %p181 = pneg %p50
        $region22: #{tpu_custom_call.1} parent=19 // pred_check_branch
          %183 = sbr.rel (%p181) target = $region24
        $region23: #{tpu_custom_call.1} parent=19 // pred_region
          %s184 = smul.u32 2, %s24
          %p185 = scmp.lt.s32.totalorder %s23, 1
          %s186 = scalar_select %p185, %s23, 1
          %p187 = scmp.lt.s32.totalorder %s184, 1
          %s188 = scalar_select %p187, %s184, 1
          %s189 = smul.addr %s186, 2
          %s190 = sadd.s32 %s188, %s189
          %s191 = smul.addr %s190, 4
          %s192 = scalar_lea.vmem %s0, %s191
          %s193 = smul.u32 2, %s24
        $region24: #{tpu_custom_call.1} parent=19 // pred_fallthru
          _
        // Predicated region
        $region25: #{tpu_custom_call.1} parent=19 // pred_check
          %p194 = pneg %p78
        $region26: #{tpu_custom_call.1} parent=19 // pred_check_branch
          %196 = sbr.rel (%p194) target = $region28
        $region27: #{tpu_custom_call.1} parent=19 // pred_region
          %s197 = smul.u32 2, %s24
          %p198 = scmp.lt.s32.totalorder %s23, 1
          %s199 = scalar_select %p198, %s23, 1
          %p200 = scmp.lt.s32.totalorder %s197, 1
          %s201 = scalar_select %p200, %s197, 1
          %s202 = smul.addr %s199, 2
          %s203 = sadd.s32 %s201, %s202
          %s204 = smul.addr %s203, 4
          %s205 = scalar_lea.vmem %s1, %s204
          %s206 = smul.u32 2, %s24
        $region28: #{tpu_custom_call.1} parent=19 // pred_fallthru
          _
        // Predicated region
        $region29: #{tpu_custom_call.1} parent=19 // pred_check
          %p207 = pneg %p104
        $region30: #{tpu_custom_call.1} parent=19 // pred_check_branch
          %209 = sbr.rel (%p207) target = $region32
        $region31: #{tpu_custom_call.1} parent=19 // pred_region
          %s210 = sand.u32 %s94, 1
          %s211 = scalar_lea.sflag [#allocation3], %s210
          %s212 = sand.u32 %s94, 1
          %s213 = smul.addr %s212, 24
          %s214 = scalar_lea.vmem [#allocation2], %s213
          %216 = vsyncadd %s211, 0
          %s217 = smul.addr %s23, 6
          %s218 = smul.addr %s217, 4
          %s219 = scalar_lea.hbm %s2, %s218
          %s221 = sshll.u32 %s219, 4
          %s222 = int_to_ptr.hbm [resolvable:$true] %s221
          %s223 = sshll.u32 %s214, 4
          %s224 = int_to_ptr.vmem [resolvable:$true] %s223
          %226 = dma.hbm_to_vmem [thread:$0]  %s222, 384, %s224, %s211
        $region32: #{tpu_custom_call.1} parent=19 // pred_fallthru
          _
      $region20: #{tpu_custom_call.1} parent=5 // pred_fallthru
        _
      %p227 = scmp.le.s32.totalorder 1, %s16
      %p228 = scmp.lt.s32.totalorder %s16, 3
      %p229 = pnand %p227, %p228
      %p230 = pneg %p229
      // Predicated region
      $region33: #{tpu_custom_call.1} parent=5 // pred_check
        _
      $region34: #{tpu_custom_call.1} parent=5 // pred_check_branch
        %232 = sbr.rel (%p229) target = $region36
      $region35: #{tpu_custom_call.1} parent=5 // pred_region
        %s233 = ssub.s32 %s16, 1
        %s234 = sand.u32 %s97, 1
        %s235 = scalar_lea.sflag [#allocation3], %s234
        %s236 = sand.u32 %s97, 1
        %s237 = smul.addr %s236, 24
        %s238 = scalar_lea.vmem [#allocation2], %s237
        // Predicated region
        $region37: #{tpu_custom_call.1} parent=35 // pred_check
          %p239 = pneg %p110
        $region38: #{tpu_custom_call.1} parent=35 // pred_check_branch
          %241 = sbr.rel (%p239) target = $region40
        $region39: #{tpu_custom_call.1} parent=35 // pred_region
          %243 = dma.done %s235, 384
        $region40: #{tpu_custom_call.1} parent=35 // pred_fallthru
          _
        %s244 = smul.u32 2, %s26
        %p245 = scmp.lt.s32.totalorder %s25, 1
        %s246 = scalar_select %p245, %s25, 1
        %p247 = scmp.lt.s32.totalorder %s244, 1
        %s248 = scalar_select %p247, %s244, 1
        %s249 = smul.addr %s246, 2
        %s250 = sadd.s32 %s248, %s249
        %s251 = smul.addr %s250, 4
        %s252 = scalar_lea.vmem %s0, %s251
        %p253 = pneg %p56
        %p254 = pneg %p53
        %s255 = smul.u32 2, %s26
        %p256 = scmp.lt.s32.totalorder %s25, 1
        %s257 = scalar_select %p256, %s25, 1
        %p258 = scmp.lt.s32.totalorder %s255, 1
        %s259 = scalar_select %p258, %s255, 1
        %s260 = smul.addr %s257, 2
        %s261 = sadd.s32 %s259, %s260
        %s262 = smul.addr %s261, 4
        %s263 = scalar_lea.vmem %s1, %s262
        %p264 = pneg %p84
        %p265 = pneg %p81
        %s266 = sand.u32 %s97, 1
        %s267 = scalar_lea.sflag [#allocation3], %s266
        %s268 = sand.u32 %s97, 1
        %s269 = smul.addr %s268, 24
        %s270 = scalar_lea.vmem [#allocation2], %s269
        %p271 = pneg %p110
        %p272 = pneg %p107
        %p273 = pneg %p131
        %p274 = pneg %p128
        %p275 = pneg %p159
        %p276 = pneg %p156
        %s277 = sand.u32 %s146, 1
        %s278 = scalar_lea.sflag [#allocation4], %s277
        %s279 = sand.u32 %s146, 1
        %s280 = smul.addr %s279, 16
        %s281 = scalar_lea.vmem [#allocation5], %s280
        %s282 = smul.u32 2, %s26
        %p283 = scmp.lt.s32.totalorder %s25, 1
        %s284 = scalar_select %p283, %s25, 1
        %p285 = scmp.lt.s32.totalorder %s282, 1
        %s286 = scalar_select %p285, %s282, 1
        %s287 = smul.addr %s284, 2
        %s288 = sadd.s32 %s286, %s287
        %s289 = smul.addr %s288, 4
        %s290 = scalar_lea.vmem %s0, %s289
        %s291 = smul.u32 2, %s26
        %s292 = smul.u32 2, %s26
        %p293 = scmp.lt.s32.totalorder %s25, 1
        %s294 = scalar_select %p293, %s25, 1
        %p295 = scmp.lt.s32.totalorder %s292, 1
        %s296 = scalar_select %p295, %s292, 1
        %s297 = smul.addr %s294, 2
        %s298 = sadd.s32 %s296, %s297
        %s299 = smul.addr %s298, 4
        %s300 = scalar_lea.vmem %s1, %s299
        %s301 = smul.u32 2, %s26
        %s302 = smul.u32 2, %s26
        %v303 = vld [vmem:[%s290] sm:$0x77]
        %v304 = vld [vmem:[%s300] sm:$0x77]
        %v305 = vfloor.f32 %v303
        %v306 = vfloor.f32 %v304
        %v307 = vmax.f32 %v305, 0.0
        %v308 = vmin.f32 %v307, 15.0
        %v309 = vmax.f32 %v306, 0.0
        %v310 = vmin.f32 %v309, 15.0
        %v311 = vadd.f32 %v305, 1.0
        %v312 = vmax.f32 %v311, 0.0
        %v313 = vmin.f32 %v312, 15.0
        %v314 = vadd.f32 %v306, 1.0
        %v315 = vmax.f32 %v314, 0.0
        %v316 = vmin.f32 %v315, 15.0
        %v317 = vmax.f32 %v303, 0.0
        %v318 = vmin.f32 %v317, 15.0
        %v319 = vmax.f32 %v304, 0.0
        %v320 = vmin.f32 %v319, 15.0
        %v321 = vsub.f32 %v308, %v318
        %v322 = vadd.f32 %v321, 1.0
        %v323 = vsub.f32 %v313, %v318
        %v324 = vsub.f32 1.0, %v323
        %v325 = vsub.f32 %v310, %v320
        %v326 = vadd.f32 %v325, 1.0
        %v327 = vsub.f32 %v316, %v320
        %v328 = vsub.f32 1.0, %v327
        %v329 = vcvt.f32.s32.to.zero.pseudo %v308
        %v330 = vcvt.f32.s32.to.zero.pseudo %v313
        %v331 = vcvt.f32.s32.to.zero.pseudo %v310
        %v332 = vcvt.f32.s32.to.zero.pseudo %v316
        %v333 = vlaneseq
        %v334 = vshrl.u32 %v333, 7
        %v335 = vadd.s32 %v334, 8
        %v336 = vrot.slane %v329, 3
        %vm337 = vcmask 1040384
        %v338 = vsel %vm337, %v329, %v336
        %vm339 = vcmask 1041409
        %v340 = vsel %vm339, %v329, %v336
        %v341 = vrot.slane %v340, 1
        %vm342 = vcmask 1042434
        %v343 = vsel %vm342, %v329, %v336
        %v344 = vrot.slane %v343, 2
        %v345 = vperm.slane %v338, 0
        %v346 = vperm.slane %v338, 1
        %v347 = vperm.slane %v341, 0
        %v348 = vperm.slane %v341, 1
        %v349 = vperm.slane %v344, 0
        %v350 = vperm.slane %v344, 1
        %vm351 = vcmp.eq.s32.totalorder %v334, %v345
        %vm352 = vcmp.eq.s32.totalorder %v334, %v346
        %vm353 = vcmp.eq.s32.totalorder %v335, %v345
        %vm354 = vcmp.eq.s32.totalorder %v335, %v346
        %vm355 = vcmp.eq.s32.totalorder %v334, %v347
        %vm356 = vcmp.eq.s32.totalorder %v334, %v348
        %vm357 = vcmp.eq.s32.totalorder %v335, %v347
        %vm358 = vcmp.eq.s32.totalorder %v335, %v348
        %vm359 = vcmp.eq.s32.totalorder %v334, %v349
        %vm360 = vcmp.eq.s32.totalorder %v334, %v350
        %vm361 = vcmp.eq.s32.totalorder %v335, %v349
        %vm362 = vcmp.eq.s32.totalorder %v335, %v350
        %v364 = vrot.slane %v322, 3
        %v365 = vsel %vm337, %v322, %v364
        %v366 = vsel %vm339, %v322, %v364
        %v367 = vrot.slane %v366, 1
        %v368 = vsel %vm342, %v322, %v364
        %v369 = vrot.slane %v368, 2
        %v370 = vperm.slane %v365, 0
        %v371 = vperm.slane %v365, 1
        %v372 = vperm.slane %v367, 0
        %v373 = vperm.slane %v367, 1
        %v374 = vperm.slane %v369, 0
        %v375 = vperm.slane %v369, 1
        %v382 = vsel %vm351, %v370, 0.0
        %v383 = vsel %vm352, %v371, 0.0
        %v384 = vsel %vm353, %v370, 0.0
        %v385 = vsel %vm354, %v371, 0.0
        %v386 = vsel %vm355, %v372, 0.0
        %v387 = vsel %vm356, %v373, 0.0
        %v388 = vsel %vm357, %v372, 0.0
        %v389 = vsel %vm358, %v373, 0.0
        %v390 = vsel %vm359, %v374, 0.0
        %v391 = vsel %vm360, %v375, 0.0
        %v392 = vsel %vm361, %v374, 0.0
        %v393 = vsel %vm362, %v375, 0.0
        %v394 = vrot.slane %v330, 3
        %v395 = vsel %vm337, %v330, %v394
        %v396 = vsel %vm339, %v330, %v394
        %v397 = vrot.slane %v396, 1
        %v398 = vsel %vm342, %v330, %v394
        %v399 = vrot.slane %v398, 2
        %v400 = vperm.slane %v395, 0
        %v401 = vperm.slane %v395, 1
        %v402 = vperm.slane %v397, 0
        %v403 = vperm.slane %v397, 1
        %v404 = vperm.slane %v399, 0
        %v405 = vperm.slane %v399, 1
        %vm406 = vcmp.eq.s32.totalorder %v334, %v400
        %vm407 = vcmp.eq.s32.totalorder %v334, %v401
        %vm408 = vcmp.eq.s32.totalorder %v335, %v400
        %vm409 = vcmp.eq.s32.totalorder %v335, %v401
        %vm410 = vcmp.eq.s32.totalorder %v334, %v402
        %vm411 = vcmp.eq.s32.totalorder %v334, %v403
        %vm412 = vcmp.eq.s32.totalorder %v335, %v402
        %vm413 = vcmp.eq.s32.totalorder %v335, %v403
        %vm414 = vcmp.eq.s32.totalorder %v334, %v404
        %vm415 = vcmp.eq.s32.totalorder %v334, %v405
        %vm416 = vcmp.eq.s32.totalorder %v335, %v404
        %vm417 = vcmp.eq.s32.totalorder %v335, %v405
        %v419 = vrot.slane %v324, 3
        %v420 = vsel %vm337, %v324, %v419
        %v421 = vsel %vm339, %v324, %v419
        %v422 = vrot.slane %v421, 1
        %v423 = vsel %vm342, %v324, %v419
        %v424 = vrot.slane %v423, 2
        %v425 = vperm.slane %v420, 0
        %v426 = vperm.slane %v420, 1
        %v427 = vperm.slane %v422, 0
        %v428 = vperm.slane %v422, 1
        %v429 = vperm.slane %v424, 0
        %v430 = vperm.slane %v424, 1
        %v437 = vsel %vm406, %v425, 0.0
        %v438 = vsel %vm407, %v426, 0.0
        %v439 = vsel %vm408, %v425, 0.0
        %v440 = vsel %vm409, %v426, 0.0
        %v441 = vsel %vm410, %v427, 0.0
        %v442 = vsel %vm411, %v428, 0.0
        %v443 = vsel %vm412, %v427, 0.0
        %v444 = vsel %vm413, %v428, 0.0
        %v445 = vsel %vm414, %v429, 0.0
        %v446 = vsel %vm415, %v430, 0.0
        %v447 = vsel %vm416, %v429, 0.0
        %v448 = vsel %vm417, %v430, 0.0
        %v449 = vadd.f32 %v382, %v437
        %v450 = vadd.f32 %v383, %v438
        %v451 = vadd.f32 %v384, %v439
        %v452 = vadd.f32 %v385, %v440
        %v453 = vadd.f32 %v386, %v441
        %v454 = vadd.f32 %v387, %v442
        %v455 = vadd.f32 %v388, %v443
        %v456 = vadd.f32 %v389, %v444
        %v457 = vadd.f32 %v390, %v445
        %v458 = vadd.f32 %v391, %v446
        %v459 = vadd.f32 %v392, %v447
        %v460 = vadd.f32 %v393, %v448
        %v461 = vrot.slane %v331, 3
        %v462 = vsel %vm337, %v331, %v461
        %v463 = vsel %vm339, %v331, %v461
        %v464 = vrot.slane %v463, 1
        %v465 = vsel %vm342, %v331, %v461
        %v466 = vrot.slane %v465, 2
        %v467 = vperm.slane %v462, 0
        %v468 = vperm.slane %v462, 1
        %v469 = vperm.slane %v464, 0
        %v470 = vperm.slane %v464, 1
        %v471 = vperm.slane %v466, 0
        %v472 = vperm.slane %v466, 1
        %vm473 = vcmp.eq.s32.totalorder %v334, %v467
        %vm474 = vcmp.eq.s32.totalorder %v334, %v468
        %vm475 = vcmp.eq.s32.totalorder %v335, %v467
        %vm476 = vcmp.eq.s32.totalorder %v335, %v468
        %vm477 = vcmp.eq.s32.totalorder %v334, %v469
        %vm478 = vcmp.eq.s32.totalorder %v334, %v470
        %vm479 = vcmp.eq.s32.totalorder %v335, %v469
        %vm480 = vcmp.eq.s32.totalorder %v335, %v470
        %vm481 = vcmp.eq.s32.totalorder %v334, %v471
        %vm482 = vcmp.eq.s32.totalorder %v334, %v472
        %vm483 = vcmp.eq.s32.totalorder %v335, %v471
        %vm484 = vcmp.eq.s32.totalorder %v335, %v472
        %v486 = vrot.slane %v326, 3
        %v487 = vsel %vm337, %v326, %v486
        %v488 = vsel %vm339, %v326, %v486
        %v489 = vrot.slane %v488, 1
        %v490 = vsel %vm342, %v326, %v486
        %v491 = vrot.slane %v490, 2
        %v492 = vperm.slane %v487, 0
        %v493 = vperm.slane %v487, 1
        %v494 = vperm.slane %v489, 0
        %v495 = vperm.slane %v489, 1
        %v496 = vperm.slane %v491, 0
        %v497 = vperm.slane %v491, 1
        %v504 = vsel %vm473, %v492, 0.0
        %v505 = vsel %vm474, %v493, 0.0
        %v506 = vsel %vm475, %v492, 0.0
        %v507 = vsel %vm476, %v493, 0.0
        %v508 = vsel %vm477, %v494, 0.0
        %v509 = vsel %vm478, %v495, 0.0
        %v510 = vsel %vm479, %v494, 0.0
        %v511 = vsel %vm480, %v495, 0.0
        %v512 = vsel %vm481, %v496, 0.0
        %v513 = vsel %vm482, %v497, 0.0
        %v514 = vsel %vm483, %v496, 0.0
        %v515 = vsel %vm484, %v497, 0.0
        %v516 = vrot.slane %v332, 3
        %v517 = vsel %vm337, %v332, %v516
        %v518 = vsel %vm339, %v332, %v516
        %v519 = vrot.slane %v518, 1
        %v520 = vsel %vm342, %v332, %v516
        %v521 = vrot.slane %v520, 2
        %v522 = vperm.slane %v517, 0
        %v523 = vperm.slane %v517, 1
        %v524 = vperm.slane %v519, 0
        %v525 = vperm.slane %v519, 1
        %v526 = vperm.slane %v521, 0
        %v527 = vperm.slane %v521, 1
        %vm528 = vcmp.eq.s32.totalorder %v334, %v522
        %vm529 = vcmp.eq.s32.totalorder %v334, %v523
        %vm530 = vcmp.eq.s32.totalorder %v335, %v522
        %vm531 = vcmp.eq.s32.totalorder %v335, %v523
        %vm532 = vcmp.eq.s32.totalorder %v334, %v524
        %vm533 = vcmp.eq.s32.totalorder %v334, %v525
        %vm534 = vcmp.eq.s32.totalorder %v335, %v524
        %vm535 = vcmp.eq.s32.totalorder %v335, %v525
        %vm536 = vcmp.eq.s32.totalorder %v334, %v526
        %vm537 = vcmp.eq.s32.totalorder %v334, %v527
        %vm538 = vcmp.eq.s32.totalorder %v335, %v526
        %vm539 = vcmp.eq.s32.totalorder %v335, %v527
        %v541 = vrot.slane %v328, 3
        %v542 = vsel %vm337, %v328, %v541
        %v543 = vsel %vm339, %v328, %v541
        %v544 = vrot.slane %v543, 1
        %v545 = vsel %vm342, %v328, %v541
        %v546 = vrot.slane %v545, 2
        %v547 = vperm.slane %v542, 0
        %v548 = vperm.slane %v542, 1
        %v549 = vperm.slane %v544, 0
        %v550 = vperm.slane %v544, 1
        %v551 = vperm.slane %v546, 0
        %v552 = vperm.slane %v546, 1
        %v559 = vsel %vm528, %v547, 0.0
        %v560 = vsel %vm529, %v548, 0.0
        %v561 = vsel %vm530, %v547, 0.0
        %v562 = vsel %vm531, %v548, 0.0
        %v563 = vsel %vm532, %v549, 0.0
        %v564 = vsel %vm533, %v550, 0.0
        %v565 = vsel %vm534, %v549, 0.0
        %v566 = vsel %vm535, %v550, 0.0
        %v567 = vsel %vm536, %v551, 0.0
        %v568 = vsel %vm537, %v552, 0.0
        %v569 = vsel %vm538, %v551, 0.0
        %v570 = vsel %vm539, %v552, 0.0
        %v571 = vadd.f32 %v504, %v559
        %v572 = vadd.f32 %v505, %v560
        %v573 = vadd.f32 %v506, %v561
        %v574 = vadd.f32 %v507, %v562
        %v575 = vadd.f32 %v508, %v563
        %v576 = vadd.f32 %v509, %v564
        %v577 = vadd.f32 %v510, %v565
        %v578 = vadd.f32 %v511, %v566
        %v579 = vadd.f32 %v512, %v567
        %v580 = vadd.f32 %v513, %v568
        %v581 = vadd.f32 %v514, %v569
        %v582 = vadd.f32 %v515, %v570
        %v595 = vrot.slane %v450, 7
        %v596 = vrot.slane %v452, 7
        %v597 = vrot.slane %v454, 7
        %v598 = vrot.slane %v456, 7
        %v599 = vrot.slane %v458, 7
        %v600 = vrot.slane %v460, 7
        %v601 = vsel %vm337, %v449, %v595
        %v602 = vsel %vm339, %v449, %v595
        %v603 = vrot.slane %v602, 1
        %v604 = vsel %vm342, %v449, %v595
        %v605 = vrot.slane %v604, 2
        %vm606 = vcmask 1043459
        %v607 = vsel %vm606, %v449, %v595
        %v608 = vrot.slane %v607, 3
        %vm609 = vcmask 1044484
        %v610 = vsel %vm609, %v449, %v595
        %v611 = vrot.slane %v610, 4
        %vm612 = vcmask 1045509
        %v613 = vsel %vm612, %v449, %v595
        %v614 = vrot.slane %v613, 5
        %vm615 = vcmask 1046534
        %v616 = vsel %vm615, %v449, %v595
        %v617 = vrot.slane %v616, 6
        %vm618 = vcmask 1046528
        %v619 = vsel %vm618, %v595, %v449
        %v620 = vrot.slane %v619, 7
        %v621 = vsel %vm337, %v451, %v596
        %v622 = vsel %vm339, %v451, %v596
        %v623 = vrot.slane %v622, 1
        %v624 = vsel %vm342, %v451, %v596
        %v625 = vrot.slane %v624, 2
        %v626 = vsel %vm606, %v451, %v596
        %v627 = vrot.slane %v626, 3
        %v628 = vsel %vm609, %v451, %v596
        %v629 = vrot.slane %v628, 4
        %v630 = vsel %vm612, %v451, %v596
        %v631 = vrot.slane %v630, 5
        %v632 = vsel %vm615, %v451, %v596
        %v633 = vrot.slane %v632, 6
        %v634 = vsel %vm618, %v596, %v451
        %v635 = vrot.slane %v634, 7
        %v636 = vsel %vm337, %v453, %v597
        %v637 = vsel %vm339, %v453, %v597
        %v638 = vrot.slane %v637, 1
        %v639 = vsel %vm342, %v453, %v597
        %v640 = vrot.slane %v639, 2
        %v641 = vsel %vm606, %v453, %v597
        %v642 = vrot.slane %v641, 3
        %v643 = vsel %vm609, %v453, %v597
        %v644 = vrot.slane %v643, 4
        %v645 = vsel %vm612, %v453, %v597
        %v646 = vrot.slane %v645, 5
        %v647 = vsel %vm615, %v453, %v597
        %v648 = vrot.slane %v647, 6
        %v649 = vsel %vm618, %v597, %v453
        %v650 = vrot.slane %v649, 7
        %v651 = vsel %vm337, %v455, %v598
        %v652 = vsel %vm339, %v455, %v598
        %v653 = vrot.slane %v652, 1
        %v654 = vsel %vm342, %v455, %v598
        %v655 = vrot.slane %v654, 2
        %v656 = vsel %vm606, %v455, %v598
        %v657 = vrot.slane %v656, 3
        %v658 = vsel %vm609, %v455, %v598
        %v659 = vrot.slane %v658, 4
        %v660 = vsel %vm612, %v455, %v598
        %v661 = vrot.slane %v660, 5
        %v662 = vsel %vm615, %v455, %v598
        %v663 = vrot.slane %v662, 6
        %v664 = vsel %vm618, %v598, %v455
        %v665 = vrot.slane %v664, 7
        %v666 = vsel %vm337, %v457, %v599
        %v667 = vsel %vm339, %v457, %v599
        %v668 = vrot.slane %v667, 1
        %v669 = vsel %vm342, %v457, %v599
        %v670 = vrot.slane %v669, 2
        %v671 = vsel %vm606, %v457, %v599
        %v672 = vrot.slane %v671, 3
        %v673 = vsel %vm609, %v457, %v599
        %v674 = vrot.slane %v673, 4
        %v675 = vsel %vm612, %v457, %v599
        %v676 = vrot.slane %v675, 5
        %v677 = vsel %vm615, %v457, %v599
        %v678 = vrot.slane %v677, 6
        %v679 = vsel %vm618, %v599, %v457
        %v680 = vrot.slane %v679, 7
        %v681 = vsel %vm337, %v459, %v600
        %v682 = vsel %vm339, %v459, %v600
        %v683 = vrot.slane %v682, 1
        %v684 = vsel %vm342, %v459, %v600
        %v685 = vrot.slane %v684, 2
        %v686 = vsel %vm606, %v459, %v600
        %v687 = vrot.slane %v686, 3
        %v688 = vsel %vm609, %v459, %v600
        %v689 = vrot.slane %v688, 4
        %v690 = vsel %vm612, %v459, %v600
        %v691 = vrot.slane %v690, 5
        %v692 = vsel %vm615, %v459, %v600
        %v693 = vrot.slane %v692, 6
        %v694 = vsel %vm618, %v600, %v459
        %v695 = vrot.slane %v694, 7
        %v696 = vperm.slane %v601, 0
        %v697 = vperm.slane %v601, 1
        %v698 = vperm.slane %v603, 0
        %v699 = vperm.slane %v603, 1
        %v700 = vperm.slane %v605, 0
        %v701 = vperm.slane %v605, 1
        %v702 = vperm.slane %v608, 0
        %v703 = vperm.slane %v608, 1
        %v704 = vperm.slane %v611, 0
        %v705 = vperm.slane %v611, 1
        %v706 = vperm.slane %v614, 0
        %v707 = vperm.slane %v614, 1
        %v708 = vperm.slane %v617, 0
        %v709 = vperm.slane %v617, 1
        %v710 = vperm.slane %v620, 0
        %v711 = vperm.slane %v620, 1
        %v712 = vperm.slane %v621, 0
        %v713 = vperm.slane %v621, 1
        %v714 = vperm.slane %v623, 0
        %v715 = vperm.slane %v623, 1
        %v716 = vperm.slane %v625, 0
        %v717 = vperm.slane %v625, 1
        %v718 = vperm.slane %v627, 0
        %v719 = vperm.slane %v627, 1
        %v720 = vperm.slane %v629, 0
        %v721 = vperm.slane %v629, 1
        %v722 = vperm.slane %v631, 0
        %v723 = vperm.slane %v631, 1
        %v724 = vperm.slane %v633, 0
        %v725 = vperm.slane %v633, 1
        %v726 = vperm.slane %v635, 0
        %v727 = vperm.slane %v635, 1
        %v728 = vperm.slane %v636, 0
        %v729 = vperm.slane %v636, 1
        %v730 = vperm.slane %v638, 0
        %v731 = vperm.slane %v638, 1
        %v732 = vperm.slane %v640, 0
        %v733 = vperm.slane %v640, 1
        %v734 = vperm.slane %v642, 0
        %v735 = vperm.slane %v642, 1
        %v736 = vperm.slane %v644, 0
        %v737 = vperm.slane %v644, 1
        %v738 = vperm.slane %v646, 0
        %v739 = vperm.slane %v646, 1
        %v740 = vperm.slane %v648, 0
        %v741 = vperm.slane %v648, 1
        %v742 = vperm.slane %v650, 0
        %v743 = vperm.slane %v650, 1
        %v744 = vperm.slane %v651, 0
        %v745 = vperm.slane %v651, 1
        %v746 = vperm.slane %v653, 0
        %v747 = vperm.slane %v653, 1
        %v748 = vperm.slane %v655, 0
        %v749 = vperm.slane %v655, 1
        %v750 = vperm.slane %v657, 0
        %v751 = vperm.slane %v657, 1
        %v752 = vperm.slane %v659, 0
        %v753 = vperm.slane %v659, 1
        %v754 = vperm.slane %v661, 0
        %v755 = vperm.slane %v661, 1
        %v756 = vperm.slane %v663, 0
        %v757 = vperm.slane %v663, 1
        %v758 = vperm.slane %v665, 0
        %v759 = vperm.slane %v665, 1
        %v760 = vperm.slane %v666, 0
        %v761 = vperm.slane %v666, 1
        %v762 = vperm.slane %v668, 0
        %v763 = vperm.slane %v668, 1
        %v764 = vperm.slane %v670, 0
        %v765 = vperm.slane %v670, 1
        %v766 = vperm.slane %v672, 0
        %v767 = vperm.slane %v672, 1
        %v768 = vperm.slane %v674, 0
        %v769 = vperm.slane %v674, 1
        %v770 = vperm.slane %v676, 0
        %v771 = vperm.slane %v676, 1
        %v772 = vperm.slane %v678, 0
        %v773 = vperm.slane %v678, 1
        %v774 = vperm.slane %v680, 0
        %v775 = vperm.slane %v680, 1
        %v776 = vperm.slane %v681, 0
        %v777 = vperm.slane %v681, 1
        %v778 = vperm.slane %v683, 0
        %v779 = vperm.slane %v683, 1
        %v780 = vperm.slane %v685, 0
        %v781 = vperm.slane %v685, 1
        %v782 = vperm.slane %v687, 0
        %v783 = vperm.slane %v687, 1
        %v784 = vperm.slane %v689, 0
        %v785 = vperm.slane %v689, 1
        %v786 = vperm.slane %v691, 0
        %v787 = vperm.slane %v691, 1
        %v788 = vperm.slane %v693, 0
        %v789 = vperm.slane %v693, 1
        %v790 = vperm.slane %v695, 0
        %v791 = vperm.slane %v695, 1
        %v888 = vmul.f32 %v696, %v571
        %v889 = vmul.f32 %v697, %v572
        %v890 = vmul.f32 %v696, %v573
        %v891 = vmul.f32 %v697, %v574
        %v892 = vmul.f32 %v698, %v571
        %v893 = vmul.f32 %v699, %v572
        %v894 = vmul.f32 %v698, %v573
        %v895 = vmul.f32 %v699, %v574
        %v896 = vmul.f32 %v700, %v571
        %v897 = vmul.f32 %v701, %v572
        %v898 = vmul.f32 %v700, %v573
        %v899 = vmul.f32 %v701, %v574
        %v900 = vmul.f32 %v702, %v571
        %v901 = vmul.f32 %v703, %v572
        %v902 = vmul.f32 %v702, %v573
        %v903 = vmul.f32 %v703, %v574
        %v904 = vmul.f32 %v704, %v571
        %v905 = vmul.f32 %v705, %v572
        %v906 = vmul.f32 %v704, %v573
        %v907 = vmul.f32 %v705, %v574
        %v908 = vmul.f32 %v706, %v571
        %v909 = vmul.f32 %v707, %v572
        %v910 = vmul.f32 %v706, %v573
        %v911 = vmul.f32 %v707, %v574
        %v912 = vmul.f32 %v708, %v571
        %v913 = vmul.f32 %v709, %v572
        %v914 = vmul.f32 %v708, %v573
        %v915 = vmul.f32 %v709, %v574
        %v916 = vmul.f32 %v710, %v571
        %v917 = vmul.f32 %v711, %v572
        %v918 = vmul.f32 %v710, %v573
        %v919 = vmul.f32 %v711, %v574
        %v920 = vmul.f32 %v712, %v571
        %v921 = vmul.f32 %v713, %v572
        %v922 = vmul.f32 %v712, %v573
        %v923 = vmul.f32 %v713, %v574
        %v924 = vmul.f32 %v714, %v571
        %v925 = vmul.f32 %v715, %v572
        %v926 = vmul.f32 %v714, %v573
        %v927 = vmul.f32 %v715, %v574
        %v928 = vmul.f32 %v716, %v571
        %v929 = vmul.f32 %v717, %v572
        %v930 = vmul.f32 %v716, %v573
        %v931 = vmul.f32 %v717, %v574
        %v932 = vmul.f32 %v718, %v571
        %v933 = vmul.f32 %v719, %v572
        %v934 = vmul.f32 %v718, %v573
        %v935 = vmul.f32 %v719, %v574
        %v936 = vmul.f32 %v720, %v571
        %v937 = vmul.f32 %v721, %v572
        %v938 = vmul.f32 %v720, %v573
        %v939 = vmul.f32 %v721, %v574
        %v940 = vmul.f32 %v722, %v571
        %v941 = vmul.f32 %v723, %v572
        %v942 = vmul.f32 %v722, %v573
        %v943 = vmul.f32 %v723, %v574
        %v944 = vmul.f32 %v724, %v571
        %v945 = vmul.f32 %v725, %v572
        %v946 = vmul.f32 %v724, %v573
        %v947 = vmul.f32 %v725, %v574
        %v948 = vmul.f32 %v726, %v571
        %v949 = vmul.f32 %v727, %v572
        %v950 = vmul.f32 %v726, %v573
        %v951 = vmul.f32 %v727, %v574
        %v952 = vmul.f32 %v728, %v575
        %v953 = vmul.f32 %v729, %v576
        %v954 = vmul.f32 %v728, %v577
        %v955 = vmul.f32 %v729, %v578
        %v956 = vmul.f32 %v730, %v575
        %v957 = vmul.f32 %v731, %v576
        %v958 = vmul.f32 %v730, %v577
        %v959 = vmul.f32 %v731, %v578
        %v960 = vmul.f32 %v732, %v575
        %v961 = vmul.f32 %v733, %v576
        %v962 = vmul.f32 %v732, %v577
        %v963 = vmul.f32 %v733, %v578
        %v964 = vmul.f32 %v734, %v575
        %v965 = vmul.f32 %v735, %v576
        %v966 = vmul.f32 %v734, %v577
        %v967 = vmul.f32 %v735, %v578
        %v968 = vmul.f32 %v736, %v575
        %v969 = vmul.f32 %v737, %v576
        %v970 = vmul.f32 %v736, %v577
        %v971 = vmul.f32 %v737, %v578
        %v972 = vmul.f32 %v738, %v575
        %v973 = vmul.f32 %v739, %v576
        %v974 = vmul.f32 %v738, %v577
        %v975 = vmul.f32 %v739, %v578
        %v976 = vmul.f32 %v740, %v575
        %v977 = vmul.f32 %v741, %v576
        %v978 = vmul.f32 %v740, %v577
        %v979 = vmul.f32 %v741, %v578
        %v980 = vmul.f32 %v742, %v575
        %v981 = vmul.f32 %v743, %v576
        %v982 = vmul.f32 %v742, %v577
        %v983 = vmul.f32 %v743, %v578
        %v984 = vmul.f32 %v744, %v575
        %v985 = vmul.f32 %v745, %v576
        %v986 = vmul.f32 %v744, %v577
        %v987 = vmul.f32 %v745, %v578
        %v988 = vmul.f32 %v746, %v575
        %v989 = vmul.f32 %v747, %v576
        %v990 = vmul.f32 %v746, %v577
        %v991 = vmul.f32 %v747, %v578
        %v992 = vmul.f32 %v748, %v575
        %v993 = vmul.f32 %v749, %v576
        %v994 = vmul.f32 %v748, %v577
        %v995 = vmul.f32 %v749, %v578
        %v996 = vmul.f32 %v750, %v575
        %v997 = vmul.f32 %v751, %v576
        %v998 = vmul.f32 %v750, %v577
        %v999 = vmul.f32 %v751, %v578
        %v1000 = vmul.f32 %v752, %v575
        %v1001 = vmul.f32 %v753, %v576
        %v1002 = vmul.f32 %v752, %v577
        %v1003 = vmul.f32 %v753, %v578
        %v1004 = vmul.f32 %v754, %v575
        %v1005 = vmul.f32 %v755, %v576
        %v1006 = vmul.f32 %v754, %v577
        %v1007 = vmul.f32 %v755, %v578
        %v1008 = vmul.f32 %v756, %v575
        %v1009 = vmul.f32 %v757, %v576
        %v1010 = vmul.f32 %v756, %v577
        %v1011 = vmul.f32 %v757, %v578
        %v1012 = vmul.f32 %v758, %v575
        %v1013 = vmul.f32 %v759, %v576
        %v1014 = vmul.f32 %v758, %v577
        %v1015 = vmul.f32 %v759, %v578
        %v1016 = vmul.f32 %v760, %v579
        %v1017 = vmul.f32 %v761, %v580
        %v1018 = vmul.f32 %v760, %v581
        %v1019 = vmul.f32 %v761, %v582
        %v1020 = vmul.f32 %v762, %v579
        %v1021 = vmul.f32 %v763, %v580
        %v1022 = vmul.f32 %v762, %v581
        %v1023 = vmul.f32 %v763, %v582
        %v1024 = vmul.f32 %v764, %v579
        %v1025 = vmul.f32 %v765, %v580
        %v1026 = vmul.f32 %v764, %v581
        %v1027 = vmul.f32 %v765, %v582
        %v1028 = vmul.f32 %v766, %v579
        %v1029 = vmul.f32 %v767, %v580
        %v1030 = vmul.f32 %v766, %v581
        %v1031 = vmul.f32 %v767, %v582
        %v1032 = vmul.f32 %v768, %v579
        %v1033 = vmul.f32 %v769, %v580
        %v1034 = vmul.f32 %v768, %v581
        %v1035 = vmul.f32 %v769, %v582
        %v1036 = vmul.f32 %v770, %v579
        %v1037 = vmul.f32 %v771, %v580
        %v1038 = vmul.f32 %v770, %v581
        %v1039 = vmul.f32 %v771, %v582
        %v1040 = vmul.f32 %v772, %v579
        %v1041 = vmul.f32 %v773, %v580
        %v1042 = vmul.f32 %v772, %v581
        %v1043 = vmul.f32 %v773, %v582
        %v1044 = vmul.f32 %v774, %v579
        %v1045 = vmul.f32 %v775, %v580
        %v1046 = vmul.f32 %v774, %v581
        %v1047 = vmul.f32 %v775, %v582
        %v1048 = vmul.f32 %v776, %v579
        %v1049 = vmul.f32 %v777, %v580
        %v1050 = vmul.f32 %v776, %v581
        %v1051 = vmul.f32 %v777, %v582
        %v1052 = vmul.f32 %v778, %v579
        %v1053 = vmul.f32 %v779, %v580
        %v1054 = vmul.f32 %v778, %v581
        %v1055 = vmul.f32 %v779, %v582
        %v1056 = vmul.f32 %v780, %v579
        %v1057 = vmul.f32 %v781, %v580
        %v1058 = vmul.f32 %v780, %v581
        %v1059 = vmul.f32 %v781, %v582
        %v1060 = vmul.f32 %v782, %v579
        %v1061 = vmul.f32 %v783, %v580
        %v1062 = vmul.f32 %v782, %v581
        %v1063 = vmul.f32 %v783, %v582
        %v1064 = vmul.f32 %v784, %v579
        %v1065 = vmul.f32 %v785, %v580
        %v1066 = vmul.f32 %v784, %v581
        %v1067 = vmul.f32 %v785, %v582
        %v1068 = vmul.f32 %v786, %v579
        %v1069 = vmul.f32 %v787, %v580
        %v1070 = vmul.f32 %v786, %v581
        %v1071 = vmul.f32 %v787, %v582
        %v1072 = vmul.f32 %v788, %v579
        %v1073 = vmul.f32 %v789, %v580
        %v1074 = vmul.f32 %v788, %v581
        %v1075 = vmul.f32 %v789, %v582
        %v1076 = vmul.f32 %v790, %v579
        %v1077 = vmul.f32 %v791, %v580
        %v1078 = vmul.f32 %v790, %v581
        %v1079 = vmul.f32 %v791, %v582
        %v1080 = vpack.c.bf16 %v890, %v888
        %v1081 = vpack.c.bf16 %v891, %v889
        %v1082 = vpack.c.bf16 %v894, %v892
        %v1083 = vpack.c.bf16 %v895, %v893
        %v1084 = vpack.c.bf16 %v898, %v896
        %v1085 = vpack.c.bf16 %v899, %v897
        %v1086 = vpack.c.bf16 %v902, %v900
        %v1087 = vpack.c.bf16 %v903, %v901
        %v1088 = vpack.c.bf16 %v906, %v904
        %v1089 = vpack.c.bf16 %v907, %v905
        %v1090 = vpack.c.bf16 %v910, %v908
        %v1091 = vpack.c.bf16 %v911, %v909
        %v1092 = vpack.c.bf16 %v914, %v912
        %v1093 = vpack.c.bf16 %v915, %v913
        %v1094 = vpack.c.bf16 %v918, %v916
        %v1095 = vpack.c.bf16 %v919, %v917
        %v1096 = vpack.c.bf16 %v922, %v920
        %v1097 = vpack.c.bf16 %v923, %v921
        %v1098 = vpack.c.bf16 %v926, %v924
        %v1099 = vpack.c.bf16 %v927, %v925
        %v1100 = vpack.c.bf16 %v930, %v928
        %v1101 = vpack.c.bf16 %v931, %v929
        %v1102 = vpack.c.bf16 %v934, %v932
        %v1103 = vpack.c.bf16 %v935, %v933
        %v1104 = vpack.c.bf16 %v938, %v936
        %v1105 = vpack.c.bf16 %v939, %v937
        %v1106 = vpack.c.bf16 %v942, %v940
        %v1107 = vpack.c.bf16 %v943, %v941
        %v1108 = vpack.c.bf16 %v946, %v944
        %v1109 = vpack.c.bf16 %v947, %v945
        %v1110 = vpack.c.bf16 %v950, %v948
        %v1111 = vpack.c.bf16 %v951, %v949
        %v1112 = vpack.c.bf16 %v954, %v952
        %v1113 = vpack.c.bf16 %v955, %v953
        %v1114 = vpack.c.bf16 %v958, %v956
        %v1115 = vpack.c.bf16 %v959, %v957
        %v1116 = vpack.c.bf16 %v962, %v960
        %v1117 = vpack.c.bf16 %v963, %v961
        %v1118 = vpack.c.bf16 %v966, %v964
        %v1119 = vpack.c.bf16 %v967, %v965
        %v1120 = vpack.c.bf16 %v970, %v968
        %v1121 = vpack.c.bf16 %v971, %v969
        %v1122 = vpack.c.bf16 %v974, %v972
        %v1123 = vpack.c.bf16 %v975, %v973
        %v1124 = vpack.c.bf16 %v978, %v976
        %v1125 = vpack.c.bf16 %v979, %v977
        %v1126 = vpack.c.bf16 %v982, %v980
        %v1127 = vpack.c.bf16 %v983, %v981
        %v1128 = vpack.c.bf16 %v986, %v984
        %v1129 = vpack.c.bf16 %v987, %v985
        %v1130 = vpack.c.bf16 %v990, %v988
        %v1131 = vpack.c.bf16 %v991, %v989
        %v1132 = vpack.c.bf16 %v994, %v992
        %v1133 = vpack.c.bf16 %v995, %v993
        %v1134 = vpack.c.bf16 %v998, %v996
        %v1135 = vpack.c.bf16 %v999, %v997
        %v1136 = vpack.c.bf16 %v1002, %v1000
        %v1137 = vpack.c.bf16 %v1003, %v1001
        %v1138 = vpack.c.bf16 %v1006, %v1004
        %v1139 = vpack.c.bf16 %v1007, %v1005
        %v1140 = vpack.c.bf16 %v1010, %v1008
        %v1141 = vpack.c.bf16 %v1011, %v1009
        %v1142 = vpack.c.bf16 %v1014, %v1012
        %v1143 = vpack.c.bf16 %v1015, %v1013
        %v1144 = vpack.c.bf16 %v1018, %v1016
        %v1145 = vpack.c.bf16 %v1019, %v1017
        %v1146 = vpack.c.bf16 %v1022, %v1020
        %v1147 = vpack.c.bf16 %v1023, %v1021
        %v1148 = vpack.c.bf16 %v1026, %v1024
        %v1149 = vpack.c.bf16 %v1027, %v1025
        %v1150 = vpack.c.bf16 %v1030, %v1028
        %v1151 = vpack.c.bf16 %v1031, %v1029
        %v1152 = vpack.c.bf16 %v1034, %v1032
        %v1153 = vpack.c.bf16 %v1035, %v1033
        %v1154 = vpack.c.bf16 %v1038, %v1036
        %v1155 = vpack.c.bf16 %v1039, %v1037
        %v1156 = vpack.c.bf16 %v1042, %v1040
        %v1157 = vpack.c.bf16 %v1043, %v1041
        %v1158 = vpack.c.bf16 %v1046, %v1044
        %v1159 = vpack.c.bf16 %v1047, %v1045
        %v1160 = vpack.c.bf16 %v1050, %v1048
        %v1161 = vpack.c.bf16 %v1051, %v1049
        %v1162 = vpack.c.bf16 %v1054, %v1052
        %v1163 = vpack.c.bf16 %v1055, %v1053
        %v1164 = vpack.c.bf16 %v1058, %v1056
        %v1165 = vpack.c.bf16 %v1059, %v1057
        %v1166 = vpack.c.bf16 %v1062, %v1060
        %v1167 = vpack.c.bf16 %v1063, %v1061
        %v1168 = vpack.c.bf16 %v1066, %v1064
        %v1169 = vpack.c.bf16 %v1067, %v1065
        %v1170 = vpack.c.bf16 %v1070, %v1068
        %v1171 = vpack.c.bf16 %v1071, %v1069
        %v1172 = vpack.c.bf16 %v1074, %v1072
        %v1173 = vpack.c.bf16 %v1075, %v1073
        %v1174 = vpack.c.bf16 %v1078, %v1076
        %v1175 = vpack.c.bf16 %v1079, %v1077
        %v1176 = vld [vmem:[%s238] sm:$0xff]
        %v1177 = vld [vmem:[%s238 + $0x8] sm:$0xff]
        %v1178 = vld [vmem:[%s238 + $0x10] sm:$0xff]
        %v1179 = vld [vmem:[%s3] sm:$0xff]
        %1181 = vset.pattern.permute.xlu0 0
        %1182 = vperm.xlu0 %1181, %v1179
        %v1183 = vpop.permute.xlu0 %1182
        %v1188 = vunpack.c.l.b16 %v1176
        %v1189 = vunpack.c.h.b16 %v1176
        %v1190 = vunpack.c.l.b16 %v1177
        %v1191 = vunpack.c.h.b16 %v1177
        %v1192 = vunpack.c.l.b16 %v1178
        %v1193 = vunpack.c.h.b16 %v1178
        %v1194 = vpack.c.b16 %v1188, %v1188
        %v1195 = vpack.c.b16 %v1189, %v1189
        %v1196 = vpack.c.b16 %v1190, %v1190
        %v1197 = vpack.c.b16 %v1191, %v1191
        %v1198 = vpack.c.b16 %v1192, %v1192
        %v1199 = vpack.c.b16 %v1193, %v1193
        %1206 = vmatpush.bf16.msra.mxu0 %v1094
        %1207 = vmatpush.bf16.msra.mxu0 %v1092
        %1208 = vmatpush.bf16.msra.mxu0 %v1090
        %1209 = vmatpush.bf16.msra.mxu0 %v1088
        %1210 = vmatpush.bf16.msra.mxu0 %v1086
        %1211 = vmatpush.bf16.msra.mxu0 %v1084
        %1212 = vmatpush.bf16.msra.mxu0 %v1082
        %1213 = vmatpush.bf16.msra.mxu0 %v1080
        %1214 = vmatmul.bf16.gmra.mxu0 %v1194
        %v1215 = vpop.f32.mrf.mxu0
        %v1216 = vadd.f32 %v1183, %v1215
        %v1217 = vpop.f32.mrf.mxu0
        %1218 = vdwg.mxu0
        %1219 = vmatpush.bf16.msra.mxu0 %v1110
        %1220 = vmatpush.bf16.msra.mxu0 %v1108
        %1221 = vmatpush.bf16.msra.mxu0 %v1106
        %1222 = vmatpush.bf16.msra.mxu0 %v1104
        %1223 = vmatpush.bf16.msra.mxu0 %v1102
        %1224 = vmatpush.bf16.msra.mxu0 %v1100
        %1225 = vmatpush.bf16.msra.mxu0 %v1098
        %1226 = vmatpush.bf16.msra.mxu0 %v1096
        %1227 = vmatmul.bf16.gmra.mxu0 %v1195
        %v1228 = vpop.f32.mrf.mxu0
        %v1229 = vadd.f32 %v1216, %v1228
        %v1230 = vpop.f32.mrf.mxu0
        %1231 = vdwg.mxu0
        %1232 = vmatpush.bf16.msra.mxu0 %v1126
        %1233 = vmatpush.bf16.msra.mxu0 %v1124
        %1234 = vmatpush.bf16.msra.mxu0 %v1122
        %1235 = vmatpush.bf16.msra.mxu0 %v1120
        %1236 = vmatpush.bf16.msra.mxu0 %v1118
        %1237 = vmatpush.bf16.msra.mxu0 %v1116
        %1238 = vmatpush.bf16.msra.mxu0 %v1114
        %1239 = vmatpush.bf16.msra.mxu0 %v1112
        %1240 = vmatmul.bf16.gmra.mxu0 %v1196
        %v1241 = vpop.f32.mrf.mxu0
        %v1242 = vadd.f32 %v1229, %v1241
        %v1243 = vpop.f32.mrf.mxu0
        %1244 = vdwg.mxu0
        %1245 = vmatpush.bf16.msra.mxu0 %v1142
        %1246 = vmatpush.bf16.msra.mxu0 %v1140
        %1247 = vmatpush.bf16.msra.mxu0 %v1138
        %1248 = vmatpush.bf16.msra.mxu0 %v1136
        %1249 = vmatpush.bf16.msra.mxu0 %v1134
        %1250 = vmatpush.bf16.msra.mxu0 %v1132
        %1251 = vmatpush.bf16.msra.mxu0 %v1130
        %1252 = vmatpush.bf16.msra.mxu0 %v1128
        %1253 = vmatmul.bf16.gmra.mxu0 %v1197
        %v1254 = vpop.f32.mrf.mxu0
        %v1255 = vadd.f32 %v1242, %v1254
        %v1256 = vpop.f32.mrf.mxu0
        %1257 = vdwg.mxu0
        %1258 = vmatpush.bf16.msra.mxu0 %v1158
        %1259 = vmatpush.bf16.msra.mxu0 %v1156
        %1260 = vmatpush.bf16.msra.mxu0 %v1154
        %1261 = vmatpush.bf16.msra.mxu0 %v1152
        %1262 = vmatpush.bf16.msra.mxu0 %v1150
        %1263 = vmatpush.bf16.msra.mxu0 %v1148
        %1264 = vmatpush.bf16.msra.mxu0 %v1146
        %1265 = vmatpush.bf16.msra.mxu0 %v1144
        %1266 = vmatmul.bf16.gmra.mxu0 %v1198
        %v1267 = vpop.f32.mrf.mxu0
        %v1268 = vadd.f32 %v1255, %v1267
        %v1269 = vpop.f32.mrf.mxu0
        %1270 = vdwg.mxu0
        %1271 = vmatpush.bf16.msra.mxu0 %v1174
        %1272 = vmatpush.bf16.msra.mxu0 %v1172
        %1273 = vmatpush.bf16.msra.mxu0 %v1170
        %1274 = vmatpush.bf16.msra.mxu0 %v1168
        %1275 = vmatpush.bf16.msra.mxu0 %v1166
        %1276 = vmatpush.bf16.msra.mxu0 %v1164
        %1277 = vmatpush.bf16.msra.mxu0 %v1162
        %1278 = vmatpush.bf16.msra.mxu0 %v1160
        %1279 = vmatmul.bf16.gmra.mxu0 %v1199
        %v1280 = vpop.f32.mrf.mxu0
        %v1281 = vadd.f32 %v1268, %v1280
        %v1282 = vpop.f32.mrf.mxu0
        %1283 = vdwg.mxu0
        %1284 = vmatpush.bf16.msra.mxu0 %v1095
        %1285 = vmatpush.bf16.msra.mxu0 %v1093
        %1286 = vmatpush.bf16.msra.mxu0 %v1091
        %1287 = vmatpush.bf16.msra.mxu0 %v1089
        %1288 = vmatpush.bf16.msra.mxu0 %v1087
        %1289 = vmatpush.bf16.msra.mxu0 %v1085
        %1290 = vmatpush.bf16.msra.mxu0 %v1083
        %1291 = vmatpush.bf16.msra.mxu0 %v1081
        %1292 = vmatmul.bf16.gmra.mxu0 %v1194
        %v1293 = vpop.f32.mrf.mxu0
        %v1294 = vadd.f32 %v1183, %v1293
        %v1295 = vpop.f32.mrf.mxu0
        %1296 = vdwg.mxu0
        %1297 = vmatpush.bf16.msra.mxu0 %v1111
        %1298 = vmatpush.bf16.msra.mxu0 %v1109
        %1299 = vmatpush.bf16.msra.mxu0 %v1107
        %1300 = vmatpush.bf16.msra.mxu0 %v1105
        %1301 = vmatpush.bf16.msra.mxu0 %v1103
        %1302 = vmatpush.bf16.msra.mxu0 %v1101
        %1303 = vmatpush.bf16.msra.mxu0 %v1099
        %1304 = vmatpush.bf16.msra.mxu0 %v1097
        %1305 = vmatmul.bf16.gmra.mxu0 %v1195
        %v1306 = vpop.f32.mrf.mxu0
        %v1307 = vadd.f32 %v1294, %v1306
        %v1308 = vpop.f32.mrf.mxu0
        %1309 = vdwg.mxu0
        %1310 = vmatpush.bf16.msra.mxu0 %v1127
        %1311 = vmatpush.bf16.msra.mxu0 %v1125
        %1312 = vmatpush.bf16.msra.mxu0 %v1123
        %1313 = vmatpush.bf16.msra.mxu0 %v1121
        %1314 = vmatpush.bf16.msra.mxu0 %v1119
        %1315 = vmatpush.bf16.msra.mxu0 %v1117
        %1316 = vmatpush.bf16.msra.mxu0 %v1115
        %1317 = vmatpush.bf16.msra.mxu0 %v1113
        %1318 = vmatmul.bf16.gmra.mxu0 %v1196
        %v1319 = vpop.f32.mrf.mxu0
        %v1320 = vadd.f32 %v1307, %v1319
        %v1321 = vpop.f32.mrf.mxu0
        %1322 = vdwg.mxu0
        %1323 = vmatpush.bf16.msra.mxu0 %v1143
        %1324 = vmatpush.bf16.msra.mxu0 %v1141
        %1325 = vmatpush.bf16.msra.mxu0 %v1139
        %1326 = vmatpush.bf16.msra.mxu0 %v1137
        %1327 = vmatpush.bf16.msra.mxu0 %v1135
        %1328 = vmatpush.bf16.msra.mxu0 %v1133
        %1329 = vmatpush.bf16.msra.mxu0 %v1131
        %1330 = vmatpush.bf16.msra.mxu0 %v1129
        %1331 = vmatmul.bf16.gmra.mxu0 %v1197
        %v1332 = vpop.f32.mrf.mxu0
        %v1333 = vadd.f32 %v1320, %v1332
        %v1334 = vpop.f32.mrf.mxu0
        %1335 = vdwg.mxu0
        %1336 = vmatpush.bf16.msra.mxu0 %v1159
        %1337 = vmatpush.bf16.msra.mxu0 %v1157
        %1338 = vmatpush.bf16.msra.mxu0 %v1155
        %1339 = vmatpush.bf16.msra.mxu0 %v1153
        %1340 = vmatpush.bf16.msra.mxu0 %v1151
        %1341 = vmatpush.bf16.msra.mxu0 %v1149
        %1342 = vmatpush.bf16.msra.mxu0 %v1147
        %1343 = vmatpush.bf16.msra.mxu0 %v1145
        %1344 = vmatmul.bf16.gmra.mxu0 %v1198
        %v1345 = vpop.f32.mrf.mxu0
        %v1346 = vadd.f32 %v1333, %v1345
        %v1347 = vpop.f32.mrf.mxu0
        %1348 = vdwg.mxu0
        %1349 = vmatpush.bf16.msra.mxu0 %v1175
        %1350 = vmatpush.bf16.msra.mxu0 %v1173
        %1351 = vmatpush.bf16.msra.mxu0 %v1171
        %1352 = vmatpush.bf16.msra.mxu0 %v1169
        %1353 = vmatpush.bf16.msra.mxu0 %v1167
        %1354 = vmatpush.bf16.msra.mxu0 %v1165
        %1355 = vmatpush.bf16.msra.mxu0 %v1163
        %1356 = vmatpush.bf16.msra.mxu0 %v1161
        %1357 = vmatmul.bf16.gmra.mxu0 %v1199
        %v1358 = vpop.f32.mrf.mxu0
        %v1359 = vadd.f32 %v1346, %v1358
        %v1360 = vpop.f32.mrf.mxu0
        %1361 = vdwg.mxu0
        %v1362 = vxor.u32 %v1281, 2147483648
        %v1363 = vxor.u32 %v1359, 2147483648
        %v1364 = vmul.f32 %v1362, 1.442695
        %v1365 = vpow.pop %v1364
        %v1366 = vmul.f32 %v1363, 1.442695
        %v1367 = vpow.pop %v1366
        %v1368 = vadd.f32 %v1365, 1.0
        %v1369 = vadd.f32 %v1367, 1.0
        %v1370 = vrcp.pop %v1368
        %v1371 = vmul.f32 %v1368, %v1370
        %v1372 = vsub.f32 1.0, %v1371
        %v1373 = vmul.f32 %v1370, %v1372
        %v1374 = vadd.f32 %v1370, %v1373
        %vm1375 = vweird.f32 %v1368
        %vm1376 = vweird.f32 %v1370
        %vm1377 = vmor %vm1375, %vm1376
        %v1378 = vsel %vm1377, %v1370, %v1374
        %v1379 = vand.u32 2147483647, %v1368
        %vm1380 = vcmp.eq.f32.partialorder %v1379, 8.507059e+37
        %v1381 = vand.u32 %v1368, 2147483648
        %v1382 = vor.u32 1.1754944e-38, %v1381
        %v1383 = vsel %vm1380, %v1382, %v1378
        %v1384 = vmul.f32 1.0, %v1383
        %v1385 = vrcp.pop %v1369
        %v1386 = vmul.f32 %v1369, %v1385
        %v1387 = vsub.f32 1.0, %v1386
        %v1388 = vmul.f32 %v1385, %v1387
        %v1389 = vadd.f32 %v1385, %v1388
        %vm1390 = vweird.f32 %v1369
        %vm1391 = vweird.f32 %v1385
        %vm1392 = vmor %vm1390, %vm1391
        %v1393 = vsel %vm1392, %v1385, %v1389
        %v1394 = vand.u32 2147483647, %v1369
        %vm1395 = vcmp.eq.f32.partialorder %v1394, 8.507059e+37
        %v1396 = vand.u32 %v1369, 2147483648
        %v1397 = vor.u32 1.1754944e-38, %v1396
        %v1398 = vsel %vm1395, %v1397, %v1393
        %v1399 = vmul.f32 1.0, %v1398
        %v1400 = vmul.f32 %v1281, %v1384
        %v1401 = vmul.f32 %v1359, %v1399
        %1402 = vst [vmem:[%s281] sm:$0xff] %v1400
        %1403 = vst [vmem:[%s281 + $0x8] sm:$0xff] %v1401
        %s1404 = sand.u32 %s146, 1
        %s1405 = scalar_lea.sflag [#allocation4], %s1404
        %s1406 = sand.u32 %s146, 1
        %s1407 = smul.addr %s1406, 16
        %s1408 = scalar_lea.vmem [#allocation5], %s1407
        // Predicated region
        $region41: #{tpu_custom_call.1} parent=35 // pred_check
          %p1409 = pneg %p156
        $region42: #{tpu_custom_call.1} parent=35 // pred_check_branch
          %1411 = sbr.rel (%p1409) target = $region44
        $region43: #{tpu_custom_call.1} parent=35 // pred_region
          %s1412 = smul.u32 2, %s26
          %1414 = vsyncadd %s1405, 0
          %s1415 = smul.addr %s25, 2
          %s1416 = sadd.s32 %s1412, %s1415
          %s1417 = smul.addr %s1416, 8
          %s1418 = scalar_lea.hbm %s4, %s1417
          %s1420 = sshll.u32 %s1408, 4
          %s1421 = int_to_ptr.vmem [resolvable:$true] %s1420
          %s1422 = sshll.u32 %s1418, 4
          %s1423 = int_to_ptr.hbm [resolvable:$true] %s1422
          %1425 = dma.vmem_to_hbm [thread:$0]  %s1421, 256, %s1423, %s1405
        $region44: #{tpu_custom_call.1} parent=35 // pred_fallthru
          _
      $region36: #{tpu_custom_call.1} parent=5 // pred_fallthru
        _
      %p1426 = scmp.le.s32.totalorder 2, %s16
      // Predicated region
      $region45: #{tpu_custom_call.1} parent=5 // pred_check
        %p1427 = pneg %p1426
      $region46: #{tpu_custom_call.1} parent=5 // pred_check_branch
        %1429 = sbr.rel (%p1427) target = $region48
      $region47: #{tpu_custom_call.1} parent=5 // pred_region
        %s1430 = ssub.s32 %s16, 2
        // Predicated region
        $region49: #{tpu_custom_call.1} parent=47 // pred_check
          %p1431 = pneg %p162
        $region50: #{tpu_custom_call.1} parent=47 // pred_check_branch
          %1433 = sbr.rel (%p1431) target = $region52
        $region51: #{tpu_custom_call.1} parent=47 // pred_region
          %s1434 = sand.u32 %s147, 1
          %s1435 = scalar_lea.sflag [#allocation4], %s1434
          %s1436 = sand.u32 %s147, 1
          %s1437 = smul.addr %s1436, 16
          %s1438 = scalar_lea.vmem [#allocation5], %s1437
          %1440 = dma.done %s1435, 256
        $region52: #{tpu_custom_call.1} parent=47 // pred_fallthru
          _
      $region48: #{tpu_custom_call.1} parent=5 // pred_fallthru
        _
    $region6: #{tpu_custom_call.1} parent=1 // loop_footer
      %s20 = sadd.s32 1, %s16
    $region7: #{tpu_custom_call.1} parent=1 // loop_footer_branch
      %15 = sbr.rel target = $region3
    $region8: #{tpu_custom_call.1} parent=1 // loop_exit
      _
    %1441 = vsyncpa [#allocation3], 1
    %s1442 = scalar_lea.sflag [#allocation3], 1
    %1443 = vsyncpa %s1442, 1
    %1444 = vsyncpa [#allocation4], 1
    %s1445 = scalar_lea.sflag [#allocation4], 1
    %1446 = vsyncpa %s1445, 1

</llo_original>
